<compile_context>
chip_gen: v7x
topology: tpu7x:2x2x1
jax: 0.10.0
libtpu: 0.0.40
codegen_flags: <defaults>
</compile_context>

<pallas_src>
import math

import jax
import jax.numpy as jnp
from jax.experimental import pallas as pl
from jax.experimental.pallas import tpu as pltpu  # noqa: F401  (TPU backend)

# ----- model dims (small, consistent with a ViT config) -----
B = 2          # batch
S = 8          # sequence length (tokens)
H = 32         # hidden_size
NH = 4         # num_attention_heads
DH = H // NH   # head dim
M = 64         # transformer['mlp_dim']
EPS = 1e-6
R = B * S      # rows after folding batch into tokens

# packed weight-slab row layout (all sub-weights start at lane 0, sublane
# offsets are multiples of 8):
#   rows   0: 32, lanes 0:96  -> wqkv (Q columns pre-scaled by 1/sqrt(DH))
#   rows  32: 64, lanes 0:32  -> wo
#   rows  64: 96, lanes 0:64  -> w1
#   rows  96:160, lanes 0:32  -> w2
#   rows 160:168, lanes 0:96  -> packed small vectors (biases, LN params)
ROWS = 3 * H + M + 8           # 168
LANES = 128


def _layernorm_rows(v, g, b):
    # two-pass variance: matches the reference LayerNorm formula exactly.
    mu = jnp.mean(v, axis=-1, keepdims=True)
    d = v - mu
    var = jnp.mean(d * d, axis=-1, keepdims=True)
    return d * jax.lax.rsqrt(var + EPS) * g + b


def _gelu_exact(x):
    # torch.nn.functional.gelu default = exact (erf) gelu
    return 0.5 * x * (1.0 + jax.lax.erf(x * (1.0 / math.sqrt(2.0))))


def block_kernel(x_ref, w_ref, y_ref, attn_ref):
    L = w_ref.shape[0]
    x = x_ref[...]                          # (R, H) f32, batch folded into rows

    for l in range(L):                      # static unroll over fused layers
        wl = w_ref.at[l]                    # ref view, zero-cost

        wqkv = wl[0:H, 0:3 * H]             # (H, 3H)   Q part pre-scaled
        wo   = wl[H:2 * H, 0:H]             # (H, H)
        w1   = wl[2 * H:3 * H, 0:M]         # (H, M)
        w2   = wl[3 * H:3 * H + M, 0:H]     # (M, H)
        vec  = wl[3 * H + M:ROWS, 0:3 * H]  # (8, 3H) packed small params

        bqkv = vec[0:1, :]                  # (1, 3H)  Q part pre-scaled
        b1   = vec[1:2, 0:M]
        ln1g = vec[2:3, 0:H]
        ln1b = vec[3:4, 0:H]
        ln2g = vec[4:5, 0:H]
        ln2b = vec[5:6, 0:H]
        bo   = vec[6:7, 0:H]
        b2   = vec[7:8, 0:H]

        # --- attention_norm + fused QKV projection (single MXU push) ---
        h = x
        xn = _layernorm_rows(x, ln1g, ln1b)
        qkv = jnp.dot(xn, wqkv, preferred_element_type=jnp.float32) + bqkv  # (R, 3H)

        # per-head scores (B-batched einsum); softmax batched across heads
        score_parts = []
        v_heads = []
        for hd in range(NH):
            qh = qkv[:, hd * DH:(hd + 1) * DH].reshape(B, S, DH)
            kh = qkv[:, H + hd * DH:H + (hd + 1) * DH].reshape(B, S, DH)
            vh = qkv[:, 2 * H + hd * DH:2 * H + (hd + 1) * DH].reshape(B, S, DH)
            sc = jnp.einsum('bqd,bkd->bqk', qh, kh,
                            preferred_element_type=jnp.float32)             # (B, S, S)
            score_parts.append(sc.reshape(R, S))
            v_heads.append(vh)

        scores = jnp.concatenate(score_parts, axis=0)        # (NH*R, S) sublane-stacked
        mx = jnp.max(scores, axis=-1, keepdims=True)
        e = jnp.exp(scores - mx)
        inv = pl.reciprocal(jnp.sum(e, axis=-1, keepdims=True), approx=False)
        probs = e * inv                                       # (NH*R, S)

        # per-head probs @ V, contexts lane-concatenated -> single out-proj dot
        prob_parts = []
        ctx_parts = []
        for hd in range(NH):
            ph = probs[hd * R:(hd + 1) * R, :]                # (R, S)
            prob_parts.append(ph)
            ctx = jnp.einsum('bqk,bkd->bqd', ph.reshape(B, S, S), v_heads[hd],
                             preferred_element_type=jnp.float32)            # (B, S, DH)
            ctx_parts.append(ctx.reshape(R, DH))

        # one store of the whole per-layer attention slab
        attn_ref[l] = jnp.concatenate(prob_parts, axis=-1)    # (R, NH*S)

        ctx_all = jnp.concatenate(ctx_parts, axis=-1)         # (R, H)
        x1 = jnp.dot(ctx_all, wo, preferred_element_type=jnp.float32) + bo + h

        # --- ffn_norm + Mlp (fc1 -> exact gelu -> fc2) + residual ---
        xn2 = _layernorm_rows(x1, ln2g, ln2b)
        f1 = jnp.dot(xn2, w1, preferred_element_type=jnp.float32) + b1
        g = _gelu_exact(f1)
        x = jnp.dot(g, w2, preferred_element_type=jnp.float32) + b2 + x1
        # TODO(synk): dropout layers are identity at inference; no RNG masking emitted.

    y_ref[...] = x


def pack_params(layer_params):
    """Pack per-layer weights/biases into one (L, 168, 128) f32 slab.

    Runs ONCE at model init (outside the jitted forward).  Folds the
    1/sqrt(DH) attention scale into the Q columns/bias of the fused QKV.
    """
    L = len(layer_params)
    scale = 1.0 / math.sqrt(DH)
    W = jnp.zeros((L, ROWS, LANES), jnp.float32)
    for l, p in enumerate(layer_params):
        wqkv = jnp.concatenate([p["wq"] * scale, p["wk"], p["wv"]], axis=1)  # (H, 3H)
        bqkv = jnp.concatenate([p["bq"] * scale, p["bk"], p["bv"]], axis=1)  # (1, 3H)
        vec = jnp.zeros((8, 3 * H), jnp.float32)
        vec = vec.at[0, :].set(bqkv[0])
        vec = vec.at[1, :M].set(p["b1"][0])
        vec = vec.at[2, :H].set(p["ln1_g"][0])
        vec = vec.at[3, :H].set(p["ln1_b"][0])
        vec = vec.at[4, :H].set(p["ln2_g"][0])
        vec = vec.at[5, :H].set(p["ln2_b"][0])
        vec = vec.at[6, :H].set(p["bo"][0])
        vec = vec.at[7, :H].set(p["b2"][0])

        W = W.at[l, 0:H, 0:3 * H].set(wqkv)
        W = W.at[l, H:2 * H, 0:H].set(p["wo"])
        W = W.at[l, 2 * H:3 * H, 0:M].set(p["w1"])
        W = W.at[l, 3 * H + 0:3 * H + M, 0:H].set(p["w2"])
        W = W.at[l, 3 * H + M:ROWS, 0:3 * H].set(vec)
    return W


@jax.jit
def block_forward(x, wslab):
    """x: (B, S, H) f32.  wslab: (L, 168, 128) pre-packed weight slab."""
    L = wslab.shape[0]
    x2d = x.reshape(R, H)                     # fold batch into rows

    y2d, attn_flat = pl.pallas_call(
        block_kernel,
        out_shape=(
            jax.ShapeDtypeStruct((R, H), jnp.float32),
            jax.ShapeDtypeStruct((L, R, NH * S), jnp.float32),
        ),
    )(x2d, wslab)

    y = y2d.reshape(B, S, H)
    # attn_flat[l, b*S+q, h*S+k] -> (L, B, NH, S, S) outside the kernel
    attn = attn_flat.reshape(L, B, S, NH, S).transpose(0, 1, 3, 2, 4)
    return y, attn


# ----- pure-JAX reference (mirrors the PyTorch Block.forward exactly) -----
def block_reference(x, p):
    def ln(v, g, b):
        mu = jnp.mean(v, axis=-1, keepdims=True)
        var = jnp.mean((v - mu) ** 2, axis=-1, keepdims=True)
        return (v - mu) / jnp.sqrt(var + EPS) * g + b

    h = x
    xn = ln(x, p["ln1_g"], p["ln1_b"])
    q = xn @ p["wq"] + p["bq"]
    k = xn @ p["wk"] + p["bk"]
    v = xn @ p["wv"] + p["bv"]
    qh = q.reshape(B, S, NH, DH).transpose(0, 2, 1, 3)
    kh = k.reshape(B, S, NH, DH).transpose(0, 2, 1, 3)
    vh = v.reshape(B, S, NH, DH).transpose(0, 2, 1, 3)
    scores = jnp.einsum("bhqd,bhkd->bhqk", qh, kh) / math.sqrt(DH)
    probs = jax.nn.softmax(scores, axis=-1)
    ctx = jnp.einsum("bhqk,bhkd->bhqd", probs, vh)
    ctx = ctx.transpose(0, 2, 1, 3).reshape(B, S, H)
    attn_out = ctx @ p["wo"] + p["bo"]
    x1 = attn_out + h
    h2 = x1
    xn2 = ln(x1, p["ln2_g"], p["ln2_b"])
    f1 = xn2 @ p["w1"] + p["b1"]
    g = jax.nn.gelu(f1, approximate=False)
    f2 = g @ p["w2"] + p["b2"]
    return f2 + h2, probs


def make_params(key):
    ks = jax.random.split(key, 12)

    def xavier(k, shape):
        fan_in, fan_out = shape
        lim = math.sqrt(6.0 / (fan_in + fan_out))
        return jax.random.uniform(k, shape, jnp.float32, -lim, lim)

    # weights stored already transposed so forward is x @ W + b (== torch Linear)
    return {
        "ln1_g": jnp.ones((1, H), jnp.float32),
        "ln1_b": jnp.zeros((1, H), jnp.float32),
        "ln2_g": jnp.ones((1, H), jnp.float32),
        "ln2_b": jnp.zeros((1, H), jnp.float32),
        "wq": xavier(ks[0], (H, H)),
        "wk": xavier(ks[1], (H, H)),
        "wv": xavier(ks[2], (H, H)),
        "wo": xavier(ks[3], (H, H)),
        "bq": jax.random.normal(ks[4], (1, H), jnp.float32) * 1e-2,
        "bk": jax.random.normal(ks[5], (1, H), jnp.float32) * 1e-2,
        "bv": jax.random.normal(ks[6], (1, H), jnp.float32) * 1e-2,
        "bo": jax.random.normal(ks[7], (1, H), jnp.float32) * 1e-2,
        "w1": xavier(ks[8], (H, M)),
        "b1": jax.random.normal(ks[9], (1, M), jnp.float32) * 1e-6,
        "w2": xavier(ks[10], (M, H)),
        "b2": jax.random.normal(ks[11], (1, H), jnp.float32) * 1e-6,
    }


if __name__ == "__main__":
    key = jax.random.PRNGKey(0)
    kx, kp = jax.random.split(key)
    x = jax.random.normal(kx, (B, S, H), jnp.float32)

    # L=1 is exactly the original single Block; L=2 demonstrates the fused
    # multi-layer path (the main perf lever: one pallas_call for many Blocks).
    for L in (1, 2):
        layer_params = [make_params(jax.random.fold_in(kp, l)) for l in range(L)]
        wslab = pack_params(layer_params)          # packed once, outside the jit

        y, attn_w = jax.block_until_ready(block_forward(x, wslab))

        # reference: apply the exact Block forward L times
        xr = x
        probs_all = []
        for p in layer_params:
            xr, pr = block_reference(xr, p)
            probs_all.append(pr)
        probs_ref = jnp.stack(probs_all, axis=0)

        assert y.shape == (B, S, H) and attn_w.shape == (L, B, NH, S, S)
        assert jnp.allclose(y, xr, atol=2e-4, rtol=2e-4), \
            float(jnp.max(jnp.abs(y - xr)))
        assert jnp.allclose(attn_w, probs_ref, atol=2e-4, rtol=2e-4), \
            float(jnp.max(jnp.abs(attn_w - probs_ref)))

    print("KERNEL_OK")
</pallas_src>

<mosaic_0001>
module attributes {stable_mosaic.version = 11 : i64} {
  func.func @block_kernel(%arg0: memref<16x32xf32, #tpu.memory_space<vmem>>, %arg1: memref<1x168x128xf32, #tpu.memory_space<vmem>>, %arg2: memref<16x32xf32, #tpu.memory_space<vmem>>, %arg3: memref<1x16x32xf32, #tpu.memory_space<vmem>>) attributes {dimension_semantics = [], scalar_prefetch = 0 : i64, scratch_operands = 0 : i64, tpu.core_type = #tpu.core_type<tc>} {
    %c0 = arith.constant 0 : index
    %c0_0 = arith.constant 0 : index
    %0 = vector.load %arg0[%c0, %c0_0] : memref<16x32xf32, #tpu.memory_space<vmem>>, vector<16x32xf32>
    %c0_i32 = arith.constant 0 : i32
    %c0_i32_1 = arith.constant 0 : i32
    %c0_i32_2 = arith.constant 0 : i32
    %1 = tpu.memref_slice %arg1[%c0_i32, %c0_i32_1, %c0_i32_2] : memref<1x168x128xf32, #tpu.memory_space<vmem>> -> memref<1x168x128xf32, #tpu.memory_space<vmem>>
    %2 = tpu.memref_squeeze %1 : memref<1x168x128xf32, #tpu.memory_space<vmem>> -> memref<168x128xf32, #tpu.memory_space<vmem>>
    %c0_3 = arith.constant 0 : index
    %c0_4 = arith.constant 0 : index
    %3 = vector.load %2[%c0_3, %c0_4] : memref<168x128xf32, #tpu.memory_space<vmem>>, vector<32x96xf32>
    %c0_i32_5 = arith.constant 0 : i32
    %c0_i32_6 = arith.constant 0 : i32
    %c0_i32_7 = arith.constant 0 : i32
    %4 = tpu.memref_slice %arg1[%c0_i32_5, %c0_i32_6, %c0_i32_7] : memref<1x168x128xf32, #tpu.memory_space<vmem>> -> memref<1x168x128xf32, #tpu.memory_space<vmem>>
    %5 = tpu.memref_squeeze %4 : memref<1x168x128xf32, #tpu.memory_space<vmem>> -> memref<168x128xf32, #tpu.memory_space<vmem>>
    %c32 = arith.constant 32 : index
    %c0_8 = arith.constant 0 : index
    %6 = vector.load %5[%c32, %c0_8] : memref<168x128xf32, #tpu.memory_space<vmem>>, vector<32x32xf32>
    %c0_i32_9 = arith.constant 0 : i32
    %c0_i32_10 = arith.constant 0 : i32
    %c0_i32_11 = arith.constant 0 : i32
    %7 = tpu.memref_slice %arg1[%c0_i32_9, %c0_i32_10, %c0_i32_11] : memref<1x168x128xf32, #tpu.memory_space<vmem>> -> memref<1x168x128xf32, #tpu.memory_space<vmem>>
    %8 = tpu.memref_squeeze %7 : memref<1x168x128xf32, #tpu.memory_space<vmem>> -> memref<168x128xf32, #tpu.memory_space<vmem>>
    %c64 = arith.constant 64 : index
    %c0_12 = arith.constant 0 : index
    %9 = vector.load %8[%c64, %c0_12] : memref<168x128xf32, #tpu.memory_space<vmem>>, vector<32x64xf32>
    %c0_i32_13 = arith.constant 0 : i32
    %c0_i32_14 = arith.constant 0 : i32
    %c0_i32_15 = arith.constant 0 : i32
    %10 = tpu.memref_slice %arg1[%c0_i32_13, %c0_i32_14, %c0_i32_15] : memref<1x168x128xf32, #tpu.memory_space<vmem>> -> memref<1x168x128xf32, #tpu.memory_space<vmem>>
    %11 = tpu.memref_squeeze %10 : memref<1x168x128xf32, #tpu.memory_space<vmem>> -> memref<168x128xf32, #tpu.memory_space<vmem>>
    %c96 = arith.constant 96 : index
    %c0_16 = arith.constant 0 : index
    %12 = vector.load %11[%c96, %c0_16] : memref<168x128xf32, #tpu.memory_space<vmem>>, vector<64x32xf32>
    %c0_i32_17 = arith.constant 0 : i32
    %c0_i32_18 = arith.constant 0 : i32
    %c0_i32_19 = arith.constant 0 : i32
    %13 = tpu.memref_slice %arg1[%c0_i32_17, %c0_i32_18, %c0_i32_19] : memref<1x168x128xf32, #tpu.memory_space<vmem>> -> memref<1x168x128xf32, #tpu.memory_space<vmem>>
    %14 = tpu.memref_squeeze %13 : memref<1x168x128xf32, #tpu.memory_space<vmem>> -> memref<168x128xf32, #tpu.memory_space<vmem>>
    %c160 = arith.constant 160 : index
    %c0_20 = arith.constant 0 : index
    %15 = vector.load %14[%c160, %c0_20] : memref<168x128xf32, #tpu.memory_space<vmem>>, vector<8x96xf32>
    %16 = vector.extract_strided_slice %15 {offsets = [0, 0], sizes = [1, 96], strides = [1, 1]} : vector<8x96xf32> to vector<1x96xf32>
    %17 = vector.extract_strided_slice %15 {offsets = [1, 0], sizes = [1, 64], strides = [1, 1]} : vector<8x96xf32> to vector<1x64xf32>
    %18 = vector.extract_strided_slice %15 {offsets = [2, 0], sizes = [1, 32], strides = [1, 1]} : vector<8x96xf32> to vector<1x32xf32>
    %19 = vector.extract_strided_slice %15 {offsets = [3, 0], sizes = [1, 32], strides = [1, 1]} : vector<8x96xf32> to vector<1x32xf32>
    %20 = vector.extract_strided_slice %15 {offsets = [4, 0], sizes = [1, 32], strides = [1, 1]} : vector<8x96xf32> to vector<1x32xf32>
    %21 = vector.extract_strided_slice %15 {offsets = [5, 0], sizes = [1, 32], strides = [1, 1]} : vector<8x96xf32> to vector<1x32xf32>
    %22 = vector.extract_strided_slice %15 {offsets = [6, 0], sizes = [1, 32], strides = [1, 1]} : vector<8x96xf32> to vector<1x32xf32>
    %23 = vector.extract_strided_slice %15 {offsets = [7, 0], sizes = [1, 32], strides = [1, 1]} : vector<8x96xf32> to vector<1x32xf32>
    %cst = arith.constant dense<0.000000e+00> : vector<16xf32>
    %24 = vector.multi_reduction <add>, %0, %cst [1] : vector<16x32xf32> to vector<16xf32>
    %25 = vector.shape_cast %24 : vector<16xf32> to vector<16x1xf32>
    %cst_21 = arith.constant 3.200000e+01 : f32
    %26 = vector.broadcast %cst_21 : f32 to vector<16x1xf32>
    %27 = arith.divf %25, %26 : vector<16x1xf32>
    %28 = vector.broadcast %27 : vector<16x1xf32> to vector<16x32xf32>
    %29 = arith.subf %0, %28 : vector<16x32xf32>
    %30 = arith.mulf %29, %29 : vector<16x32xf32>
    %cst_22 = arith.constant dense<0.000000e+00> : vector<16xf32>
    %31 = vector.multi_reduction <add>, %30, %cst_22 [1] : vector<16x32xf32> to vector<16xf32>
    %32 = vector.shape_cast %31 : vector<16xf32> to vector<16x1xf32>
    %cst_23 = arith.constant 3.200000e+01 : f32
    %33 = vector.broadcast %cst_23 : f32 to vector<16x1xf32>
    %34 = arith.divf %32, %33 : vector<16x1xf32>
    %cst_24 = arith.constant 9.99999997E-7 : f32
    %35 = vector.broadcast %cst_24 : f32 to vector<16x1xf32>
    %36 = arith.addf %34, %35 : vector<16x1xf32>
    %37 = math.rsqrt %36 : vector<16x1xf32>
    %38 = vector.broadcast %37 : vector<16x1xf32> to vector<16x32xf32>
    %39 = arith.mulf %29, %38 : vector<16x32xf32>
    %40 = vector.broadcast %18 : vector<1x32xf32> to vector<16x32xf32>
    %41 = arith.mulf %39, %40 : vector<16x32xf32>
    %42 = vector.broadcast %19 : vector<1x32xf32> to vector<16x32xf32>
    %43 = arith.addf %41, %42 : vector<16x32xf32>
    %cst_25 = arith.constant dense<0.000000e+00> : vector<16x96xf32>
    %44 = tpu.matmul %43, %3, %cst_25 {dimension_numbers = #tpu.dot_dimension_numbers<[1], [0], [0], [1], [0, 0, 1, 1], [], []>} : vector<16x32xf32>, vector<32x96xf32>, vector<16x96xf32> -> vector<16x96xf32>
    %45 = vector.broadcast %16 : vector<1x96xf32> to vector<16x96xf32>
    %46 = arith.addf %44, %45 : vector<16x96xf32>
    %47 = vector.extract_strided_slice %46 {offsets = [0, 0], sizes = [16, 8], strides = [1, 1]} : vector<16x96xf32> to vector<16x8xf32>
    %48 = vector.shape_cast %47 : vector<16x8xf32> to vector<2x8x8xf32>
    %49 = vector.extract_strided_slice %46 {offsets = [0, 32], sizes = [16, 8], strides = [1, 1]} : vector<16x96xf32> to vector<16x8xf32>
    %50 = vector.shape_cast %49 : vector<16x8xf32> to vector<2x8x8xf32>
    %51 = vector.extract_strided_slice %46 {offsets = [0, 64], sizes = [16, 8], strides = [1, 1]} : vector<16x96xf32> to vector<16x8xf32>
    %52 = vector.shape_cast %51 : vector<16x8xf32> to vector<2x8x8xf32>
    "tpu.trace_start"() <{level = 10 : i32, message = "bqd,bkd->bqk"}> : () -> ()
    %cst_26 = arith.constant dense<0.000000e+00> : vector<2x8x8xf32>
    %53 = tpu.matmul %48, %50, %cst_26 {dimension_numbers = #tpu.dot_dimension_numbers<[2], [2], [1], [1], [0, 0, 0, 1, 1, 1], [0], [0]>} : vector<2x8x8xf32>, vector<2x8x8xf32>, vector<2x8x8xf32> -> vector<2x8x8xf32>
    "tpu.trace_stop"() : () -> ()
    %54 = vector.shape_cast %53 : vector<2x8x8xf32> to vector<16x8xf32>
    %55 = vector.extract_strided_slice %46 {offsets = [0, 8], sizes = [16, 8], strides = [1, 1]} : vector<16x96xf32> to vector<16x8xf32>
    %56 = vector.shape_cast %55 : vector<16x8xf32> to vector<2x8x8xf32>
    %57 = vector.extract_strided_slice %46 {offsets = [0, 40], sizes = [16, 8], strides = [1, 1]} : vector<16x96xf32> to vector<16x8xf32>
    %58 = vector.shape_cast %57 : vector<16x8xf32> to vector<2x8x8xf32>
    %59 = vector.extract_strided_slice %46 {offsets = [0, 72], sizes = [16, 8], strides = [1, 1]} : vector<16x96xf32> to vector<16x8xf32>
    %60 = vector.shape_cast %59 : vector<16x8xf32> to vector<2x8x8xf32>
    "tpu.trace_start"() <{level = 10 : i32, message = "bqd,bkd->bqk"}> : () -> ()
    %cst_27 = arith.constant dense<0.000000e+00> : vector<2x8x8xf32>
    %61 = tpu.matmul %56, %58, %cst_27 {dimension_numbers = #tpu.dot_dimension_numbers<[2], [2], [1], [1], [0, 0, 0, 1, 1, 1], [0], [0]>} : vector<2x8x8xf32>, vector<2x8x8xf32>, vector<2x8x8xf32> -> vector<2x8x8xf32>
    "tpu.trace_stop"() : () -> ()
    %62 = vector.shape_cast %61 : vector<2x8x8xf32> to vector<16x8xf32>
    %63 = vector.extract_strided_slice %46 {offsets = [0, 16], sizes = [16, 8], strides = [1, 1]} : vector<16x96xf32> to vector<16x8xf32>
    %64 = vector.shape_cast %63 : vector<16x8xf32> to vector<2x8x8xf32>
    %65 = vector.extract_strided_slice %46 {offsets = [0, 48], sizes = [16, 8], strides = [1, 1]} : vector<16x96xf32> to vector<16x8xf32>
    %66 = vector.shape_cast %65 : vector<16x8xf32> to vector<2x8x8xf32>
    %67 = vector.extract_strided_slice %46 {offsets = [0, 80], sizes = [16, 8], strides = [1, 1]} : vector<16x96xf32> to vector<16x8xf32>
    %68 = vector.shape_cast %67 : vector<16x8xf32> to vector<2x8x8xf32>
    "tpu.trace_start"() <{level = 10 : i32, message = "bqd,bkd->bqk"}> : () -> ()
    %cst_28 = arith.constant dense<0.000000e+00> : vector<2x8x8xf32>
    %69 = tpu.matmul %64, %66, %cst_28 {dimension_numbers = #tpu.dot_dimension_numbers<[2], [2], [1], [1], [0, 0, 0, 1, 1, 1], [0], [0]>} : vector<2x8x8xf32>, vector<2x8x8xf32>, vector<2x8x8xf32> -> vector<2x8x8xf32>
    "tpu.trace_stop"() : () -> ()
    %70 = vector.shape_cast %69 : vector<2x8x8xf32> to vector<16x8xf32>
    %71 = vector.extract_strided_slice %46 {offsets = [0, 24], sizes = [16, 8], strides = [1, 1]} : vector<16x96xf32> to vector<16x8xf32>
    %72 = vector.shape_cast %71 : vector<16x8xf32> to vector<2x8x8xf32>
    %73 = vector.extract_strided_slice %46 {offsets = [0, 56], sizes = [16, 8], strides = [1, 1]} : vector<16x96xf32> to vector<16x8xf32>
    %74 = vector.shape_cast %73 : vector<16x8xf32> to vector<2x8x8xf32>
    %75 = vector.extract_strided_slice %46 {offsets = [0, 88], sizes = [16, 8], strides = [1, 1]} : vector<16x96xf32> to vector<16x8xf32>
    %76 = vector.shape_cast %75 : vector<16x8xf32> to vector<2x8x8xf32>
    "tpu.trace_start"() <{level = 10 : i32, message = "bqd,bkd->bqk"}> : () -> ()
    %cst_29 = arith.constant dense<0.000000e+00> : vector<2x8x8xf32>
    %77 = tpu.matmul %72, %74, %cst_29 {dimension_numbers = #tpu.dot_dimension_numbers<[2], [2], [1], [1], [0, 0, 0, 1, 1, 1], [0], [0]>} : vector<2x8x8xf32>, vector<2x8x8xf32>, vector<2x8x8xf32> -> vector<2x8x8xf32>
    "tpu.trace_stop"() : () -> ()
    %78 = vector.shape_cast %77 : vector<2x8x8xf32> to vector<16x8xf32>
    %79 = tpu.concatenate %54, %62, %70, %78 in 0 : vector<16x8xf32>, vector<16x8xf32>, vector<16x8xf32>, vector<16x8xf32> -> vector<64x8xf32>
    %cst_30 = arith.constant dense<0xFF800000> : vector<64xf32>
    %80 = vector.multi_reduction <maximumf>, %79, %cst_30 [1] : vector<64x8xf32> to vector<64xf32>
    %81 = vector.shape_cast %80 : vector<64xf32> to vector<64x1xf32>
    %82 = vector.broadcast %81 : vector<64x1xf32> to vector<64x8xf32>
    %83 = arith.subf %79, %82 : vector<64x8xf32>
    %84 = math.exp %83 : vector<64x8xf32>
    %cst_31 = arith.constant dense<0.000000e+00> : vector<64xf32>
    %85 = vector.multi_reduction <add>, %84, %cst_31 [1] : vector<64x8xf32> to vector<64xf32>
    %86 = vector.shape_cast %85 : vector<64xf32> to vector<64x1xf32>
    %87 = tpu.reciprocal %86 : vector<64x1xf32> -> vector<64x1xf32>
    %88 = vector.broadcast %87 : vector<64x1xf32> to vector<64x8xf32>
    %89 = arith.mulf %84, %88 : vector<64x8xf32>
    %90 = vector.extract_strided_slice %89 {offsets = [0, 0], sizes = [16, 8], strides = [1, 1]} : vector<64x8xf32> to vector<16x8xf32>
    %91 = vector.shape_cast %90 : vector<16x8xf32> to vector<2x8x8xf32>
    "tpu.trace_start"() <{level = 10 : i32, message = "bqk,bkd->bqd"}> : () -> ()
    %cst_32 = arith.constant dense<0.000000e+00> : vector<2x8x8xf32>
    %92 = tpu.matmul %91, %52, %cst_32 {dimension_numbers = #tpu.dot_dimension_numbers<[2], [1], [1], [2], [0, 0, 0, 1, 1, 2], [0], [0]>} : vector<2x8x8xf32>, vector<2x8x8xf32>, vector<2x8x8xf32> -> vector<2x8x8xf32>
    "tpu.trace_stop"() : () -> ()
    %93 = vector.shape_cast %92 : vector<2x8x8xf32> to vector<16x8xf32>
    %94 = vector.extract_strided_slice %89 {offsets = [16, 0], sizes = [16, 8], strides = [1, 1]} : vector<64x8xf32> to vector<16x8xf32>
    %95 = vector.shape_cast %94 : vector<16x8xf32> to vector<2x8x8xf32>
    "tpu.trace_start"() <{level = 10 : i32, message = "bqk,bkd->bqd"}> : () -> ()
    %cst_33 = arith.constant dense<0.000000e+00> : vector<2x8x8xf32>
    %96 = tpu.matmul %95, %60, %cst_33 {dimension_numbers = #tpu.dot_dimension_numbers<[2], [1], [1], [2], [0, 0, 0, 1, 1, 2], [0], [0]>} : vector<2x8x8xf32>, vector<2x8x8xf32>, vector<2x8x8xf32> -> vector<2x8x8xf32>
    "tpu.trace_stop"() : () -> ()
    %97 = vector.shape_cast %96 : vector<2x8x8xf32> to vector<16x8xf32>
    %98 = vector.extract_strided_slice %89 {offsets = [32, 0], sizes = [16, 8], strides = [1, 1]} : vector<64x8xf32> to vector<16x8xf32>
    %99 = vector.shape_cast %98 : vector<16x8xf32> to vector<2x8x8xf32>
    "tpu.trace_start"() <{level = 10 : i32, message = "bqk,bkd->bqd"}> : () -> ()
    %cst_34 = arith.constant dense<0.000000e+00> : vector<2x8x8xf32>
    %100 = tpu.matmul %99, %68, %cst_34 {dimension_numbers = #tpu.dot_dimension_numbers<[2], [1], [1], [2], [0, 0, 0, 1, 1, 2], [0], [0]>} : vector<2x8x8xf32>, vector<2x8x8xf32>, vector<2x8x8xf32> -> vector<2x8x8xf32>
    "tpu.trace_stop"() : () -> ()
    %101 = vector.shape_cast %100 : vector<2x8x8xf32> to vector<16x8xf32>
    %102 = vector.extract_strided_slice %89 {offsets = [48, 0], sizes = [16, 8], strides = [1, 1]} : vector<64x8xf32> to vector<16x8xf32>
    %103 = vector.shape_cast %102 : vector<16x8xf32> to vector<2x8x8xf32>
    "tpu.trace_start"() <{level = 10 : i32, message = "bqk,bkd->bqd"}> : () -> ()
    %cst_35 = arith.constant dense<0.000000e+00> : vector<2x8x8xf32>
    %104 = tpu.matmul %103, %76, %cst_35 {dimension_numbers = #tpu.dot_dimension_numbers<[2], [1], [1], [2], [0, 0, 0, 1, 1, 2], [0], [0]>} : vector<2x8x8xf32>, vector<2x8x8xf32>, vector<2x8x8xf32> -> vector<2x8x8xf32>
    "tpu.trace_stop"() : () -> ()
    %105 = vector.shape_cast %104 : vector<2x8x8xf32> to vector<16x8xf32>
    %106 = tpu.concatenate %90, %94, %98, %102 in 1 : vector<16x8xf32>, vector<16x8xf32>, vector<16x8xf32>, vector<16x8xf32> -> vector<16x32xf32>
    %c0_36 = arith.constant 0 : index
    %c0_37 = arith.constant 0 : index
    %c0_38 = arith.constant 0 : index
    %107 = vector.load %arg3[%c0_36, %c0_37, %c0_38] : memref<1x16x32xf32, #tpu.memory_space<vmem>>, vector<1x16x32xf32>
    %108 = vector.shape_cast %107 : vector<1x16x32xf32> to vector<16x32xf32>
    %109 = vector.shape_cast %106 : vector<16x32xf32> to vector<1x16x32xf32>
    tpu.vector_store %arg3[%c0_36, %c0_37, %c0_38], %109 {strides = array<i32>} : memref<1x16x32xf32, #tpu.memory_space<vmem>>, vector<1x16x32xf32>,
    %110 = tpu.concatenate %93, %97, %101, %105 in 1 : vector<16x8xf32>, vector<16x8xf32>, vector<16x8xf32>, vector<16x8xf32> -> vector<16x32xf32>
    %cst_39 = arith.constant dense<0.000000e+00> : vector<16x32xf32>
    %111 = tpu.matmul %110, %6, %cst_39 {dimension_numbers = #tpu.dot_dimension_numbers<[1], [0], [0], [1], [0, 0, 1, 1], [], []>} : vector<16x32xf32>, vector<32x32xf32>, vector<16x32xf32> -> vector<16x32xf32>
    %112 = vector.broadcast %22 : vector<1x32xf32> to vector<16x32xf32>
    %113 = arith.addf %111, %112 : vector<16x32xf32>
    %114 = arith.addf %113, %0 : vector<16x32xf32>
    %cst_40 = arith.constant dense<0.000000e+00> : vector<16xf32>
    %115 = vector.multi_reduction <add>, %114, %cst_40 [1] : vector<16x32xf32> to vector<16xf32>
    %116 = vector.shape_cast %115 : vector<16xf32> to vector<16x1xf32>
    %cst_41 = arith.constant 3.200000e+01 : f32
    %117 = vector.broadcast %cst_41 : f32 to vector<16x1xf32>
    %118 = arith.divf %116, %117 : vector<16x1xf32>
    %119 = vector.broadcast %118 : vector<16x1xf32> to vector<16x32xf32>
    %120 = arith.subf %114, %119 : vector<16x32xf32>
    %121 = arith.mulf %120, %120 : vector<16x32xf32>
    %cst_42 = arith.constant dense<0.000000e+00> : vector<16xf32>
    %122 = vector.multi_reduction <add>, %121, %cst_42 [1] : vector<16x32xf32> to vector<16xf32>
    %123 = vector.shape_cast %122 : vector<16xf32> to vector<16x1xf32>
    %cst_43 = arith.constant 3.200000e+01 : f32
    %124 = vector.broadcast %cst_43 : f32 to vector<16x1xf32>
    %125 = arith.divf %123, %124 : vector<16x1xf32>
    %cst_44 = arith.constant 9.99999997E-7 : f32
    %126 = vector.broadcast %cst_44 : f32 to vector<16x1xf32>
    %127 = arith.addf %125, %126 : vector<16x1xf32>
    %128 = math.rsqrt %127 : vector<16x1xf32>
    %129 = vector.broadcast %128 : vector<16x1xf32> to vector<16x32xf32>
    %130 = arith.mulf %120, %129 : vector<16x32xf32>
    %131 = vector.broadcast %20 : vector<1x32xf32> to vector<16x32xf32>
    %132 = arith.mulf %130, %131 : vector<16x32xf32>
    %133 = vector.broadcast %21 : vector<1x32xf32> to vector<16x32xf32>
    %134 = arith.addf %132, %133 : vector<16x32xf32>
    %cst_45 = arith.constant dense<0.000000e+00> : vector<16x64xf32>
    %135 = tpu.matmul %134, %9, %cst_45 {dimension_numbers = #tpu.dot_dimension_numbers<[1], [0], [0], [1], [0, 0, 1, 1], [], []>} : vector<16x32xf32>, vector<32x64xf32>, vector<16x64xf32> -> vector<16x64xf32>
    %136 = vector.broadcast %17 : vector<1x64xf32> to vector<16x64xf32>
    %137 = arith.addf %135, %136 : vector<16x64xf32>
    %cst_46 = arith.constant 5.000000e-01 : f32
    %138 = vector.broadcast %cst_46 : f32 to vector<16x64xf32>
    %139 = arith.mulf %138, %137 : vector<16x64xf32>
    %cst_47 = arith.constant 0.707106769 : f32
    %140 = vector.broadcast %cst_47 : f32 to vector<16x64xf32>
    %141 = arith.mulf %137, %140 : vector<16x64xf32>
    %142 = math.erf %141 : vector<16x64xf32>
    %cst_48 = arith.constant 1.000000e+00 : f32
    %143 = vector.broadcast %cst_48 : f32 to vector<16x64xf32>
    %144 = arith.addf %143, %142 : vector<16x64xf32>
    %145 = arith.mulf %139, %144 : vector<16x64xf32>
    %cst_49 = arith.constant dense<0.000000e+00> : vector<16x32xf32>
    %146 = tpu.matmul %145, %12, %cst_49 {dimension_numbers = #tpu.dot_dimension_numbers<[1], [0], [0], [1], [0, 0, 1, 1], [], []>} : vector<16x64xf32>, vector<64x32xf32>, vector<16x32xf32> -> vector<16x32xf32>
    %147 = vector.broadcast %23 : vector<1x32xf32> to vector<16x32xf32>
    %148 = arith.addf %146, %147 : vector<16x32xf32>
    %149 = arith.addf %148, %114 : vector<16x32xf32>
    %c0_50 = arith.constant 0 : index
    %c0_51 = arith.constant 0 : index
    %150 = vector.load %arg2[%c0_50, %c0_51] : memref<16x32xf32, #tpu.memory_space<vmem>>, vector<16x32xf32>
    tpu.vector_store %arg2[%c0_50, %c0_51], %149 {strides = array<i32>} : memref<16x32xf32, #tpu.memory_space<vmem>>, vector<16x32xf32>,
    return
  }
}

</mosaic_0001>

<llo_original>
// kernel: block_forward.1
$region0: #{block_forward.1}
  #allocation0 [shape = 'u32[]', space=smem, size = 0x4, offset = 0x4, fixed_abs, tag = 'smem constant byte address 0x4 - core index']
  #allocation1 [shape = 'u32[144,128]{1,0:T(1,128)}', space=vmem, size = 0x12000, scoped, tag = 'internal scratch']
  %s0 = inlined_call_operand.hbm [shape: f32[16,32], index: 0, kind: input, shape index: {}]
  %s1 = inlined_call_operand.hbm [shape: f32[1,168,128], index: 1, kind: input, shape index: {}]
  %s2 = inlined_call_operand.hbm [shape: f32[16,32], index: 2, kind: output, shape index: {0}]
  %s3 = inlined_call_operand.vmem [shape: f32[1,16,32], index: 3, kind: output, shape index: {1}]
  %4 = xla_tuple %s2, %s3
  %s5 = sld [smem:[#allocation0]]
  $region34: #{block_forward.1} parent=0
    _
  %s7 = ssub.s32 1, %s5
  %s8 = scalar_select 0, %s7, %s5
  $region1: #{block_forward.1} parent=0
    #allocation2 [shape = 'u8[8192]{0}', space=vmem, size = 0x2000, scoped, tag = 'input window, operand 0, single buffered']
    #allocation3 [shape = 's32[1]{0}', space=sflag, size = 0x4, scoped, tag = 'scoped memory for block_forward.1']
    #allocation4 [shape = 's32[1]{0}', space=sflag, size = 0x4, scoped, tag = 'scoped memory for block_forward.1']
    #allocation5 [shape = 'u8[86016]{0}', space=vmem, size = 0x15000, scoped, tag = 'input window, operand 1, single buffered']
    #allocation6 [shape = 's32[1]{0}', space=sflag, size = 0x4, scoped, tag = 'scoped memory for block_forward.1']
    #allocation7 [shape = 'u8[8192]{0}', space=vmem, size = 0x2000, scoped, tag = 'output window, operand 0, single buffered']
    %9 = vsyncpa [#allocation3], 0
    %10 = vsyncpa [#allocation6], 0
    %11 = vsyncpa [#allocation4], 0
    // Predicated region
    $region2: #{block_forward.1} parent=1 // pred_check
      _
    $region3: #{block_forward.1} parent=1 // pred_check_branch
      %13 = sbr.rel (0) target = $region5
    $region4: #{block_forward.1} parent=1 // pred_region
      %s15 = ssub.s32 256, 256
      %16 = vsyncadd [#allocation3], %s15
      %s17 = sshll.u32 [#allocation2], 4
      %s18 = int_to_ptr.vmem [resolvable:$true] %s17
      %23 = dma.hbm_to_vmem [thread:$0]  %s0, 256, %s18, [#allocation3], 128, 128, 8
    $region5: #{block_forward.1} parent=1 // pred_fallthru
      _
    // Predicated region
    $region6: #{block_forward.1} parent=1 // pred_check
      _
    $region7: #{block_forward.1} parent=1 // pred_check_branch
      %25 = sbr.rel (0) target = $region9
    $region8: #{block_forward.1} parent=1 // pred_region
      %s27 = ssub.s32 2688, 2688
      %28 = vsyncadd [#allocation6], %s27
      %s29 = sshll.u32 [#allocation5], 4
      %s30 = int_to_ptr.vmem [resolvable:$true] %s29
      %35 = dma.hbm_to_vmem [thread:$0]  %s1, 2688, %s30, [#allocation6], 128, 128, 8
    $region9: #{block_forward.1} parent=1 // pred_fallthru
      _
    // Predicated region
    $region10: #{block_forward.1} parent=1 // pred_check
      _
    $region11: #{block_forward.1} parent=1 // pred_check_branch
      %37 = sbr.rel (0) target = $region13
    $region12: #{block_forward.1} parent=1 // pred_region
      %38 = dma.done [#allocation3], 256
    $region13: #{block_forward.1} parent=1 // pred_fallthru
      _
    // Predicated region
    $region14: #{block_forward.1} parent=1 // pred_check
      _
    $region15: #{block_forward.1} parent=1 // pred_check_branch
      %40 = sbr.rel (0) target = $region17
    $region16: #{block_forward.1} parent=1 // pred_region
      %41 = dma.done [#allocation6], 2688
    $region17: #{block_forward.1} parent=1 // pred_fallthru
      _
    %v42 = vld [vmem:[#allocation2] sm:$0xff]
    %v43 = vld [vmem:[#allocation2 + $0x8] sm:$0xff]
    %v44 = vld [vmem:[#allocation5] sm:$0xff]
    %v45 = vld [vmem:[#allocation5 + $0x8] sm:$0xff]
    %v46 = vld [vmem:[#allocation5 + $0x10] sm:$0xff]
    %v47 = vld [vmem:[#allocation5 + $0x18] sm:$0xff]
    %v48 = vld [vmem:[#allocation5 + $0x20] sm:$0xff]
    %v49 = vld [vmem:[#allocation5 + $0x28] sm:$0xff]
    %v50 = vld [vmem:[#allocation5 + $0x30] sm:$0xff]
    %v51 = vld [vmem:[#allocation5 + $0x38] sm:$0xff]
    %v52 = vld [vmem:[#allocation5 + $0x40] sm:$0xff]
    %v53 = vld [vmem:[#allocation5 + $0x48] sm:$0xff]
    %v54 = vld [vmem:[#allocation5 + $0x50] sm:$0xff]
    %v55 = vld [vmem:[#allocation5 + $0x58] sm:$0xff]
    %v56 = vld [vmem:[#allocation5 + $0x60] sm:$0xff]
    %v57 = vld [vmem:[#allocation5 + $0x68] sm:$0xff]
    %v58 = vld [vmem:[#allocation5 + $0x70] sm:$0xff]
    %v59 = vld [vmem:[#allocation5 + $0x78] sm:$0xff]
    %v60 = vld [vmem:[#allocation5 + $0x80] sm:$0xff]
    %v61 = vld [vmem:[#allocation5 + $0x88] sm:$0xff]
    %v62 = vld [vmem:[#allocation5 + $0x90] sm:$0xff]
    %v63 = vld [vmem:[#allocation5 + $0x98] sm:$0xff]
    %v64 = vld [vmem:[#allocation5 + $0xa0] sm:$0xff]
    %vm65 = vcmask 261120
    %v66 = vsel %vm65, %v42, 0.0
    %67 = vadd.xlane.f32.xlu0 %v66
    %v68 = vpop.xlane.xlu0 %67
    %v69 = vsel %vm65, %v43, 0.0
    %70 = vadd.xlane.f32.xlu0 %v69
    %v71 = vpop.xlane.xlu0 %70
    %v72 = vrcp.pop 32.0
    %v73 = vmul.f32 %v68, %v72
    %v74 = vmul.f32 %v71, %v72
    %v75 = vsub.f32 %v42, %v73
    %v76 = vsub.f32 %v43, %v74
    %v77 = vmul.f32 %v75, %v75
    %v78 = vmul.f32 %v76, %v76
    %v79 = vsel %vm65, %v77, 0.0
    %80 = vadd.xlane.f32.xlu0 %v79
    %v81 = vpop.xlane.xlu0 %80
    %v82 = vsel %vm65, %v78, 0.0
    %83 = vadd.xlane.f32.xlu0 %v82
    %v84 = vpop.xlane.xlu0 %83
    %v85 = vmul.f32 %v81, %v72
    %v86 = vmul.f32 %v84, %v72
    %v87 = vadd.f32 %v85, 1e-06
    %v88 = vadd.f32 %v86, 1e-06
    %v89 = vrsqrt.pop %v87
    %v90 = vrsqrt.pop %v88
    %v91 = vmul.f32 %v75, %v89
    %v92 = vmul.f32 %v76, %v90
    %v93 = vlaneseq
    %v94 = vshrl.u32 %v93, 7
    %v95 = vsub.s32 2, %v94
    %v96 = vrot.slane %v64, %v95
    %v97 = vmul.f32 %v91, %v96
    %v98 = vmul.f32 %v92, %v96
    %v99 = vlaneseq
    %v100 = vshrl.u32 %v99, 7
    %v101 = vsub.s32 3, %v100
    %v102 = vrot.slane %v64, %v101
    %v103 = vadd.f32 %v97, %v102
    %v104 = vadd.f32 %v98, %v102
    %v105 = vlaneseq
    %v106 = vshrl.u32 %v105, 7
    %v107 = vsub.s32 0, %v106
    %v108 = vrot.slane %v64, %v107
    %v110 = vsel %vm65, %v103, 0
    %v113 = vsel %vm65, %v104, 0
    %115 = vmatprep.subr.mxu0 0.0
    %116 = vmatpush1.msra.mxu0 %v44
    %117 = vmatprep.subr.mxu0 0.0
    %118 = vmatpush1.msra.mxu0 %v45
    %119 = vmatprep.subr.mxu0 0.0
    %120 = vmatpush1.msra.mxu0 %v46
    %121 = vmatprep.subr.mxu0 0.0
    %122 = vmatpush1.msra.mxu0 %v47
    %123 = vmatprep.subr.mxu0 0.0
    %124 = vmatpush1.msra.mxu0 0.0
    %125 = vmatprep.subr.mxu0 0.0
    %126 = vmatpush1.msra.mxu0 0.0
    %127 = vmatprep.subr.mxu0 0.0
    %128 = vmatpush1.msra.mxu0 0.0
    %129 = vmatprep.subr.mxu0 0.0
    %130 = vmatpush1.msra.mxu0 0.0
    %131 = vmatprep.subr.mxu0 0.0
    %132 = vmatpush1.msra.mxu0 0.0
    %133 = vmatprep.subr.mxu0 0.0
    %134 = vmatpush1.msra.mxu0 0.0
    %135 = vmatprep.subr.mxu0 0.0
    %136 = vmatpush1.msra.mxu0 0.0
    %137 = vmatprep.subr.mxu0 0.0
    %138 = vmatpush1.msra.mxu0 0.0
    %139 = vmatprep.subr.mxu0 0.0
    %140 = vmatpush1.msra.mxu0 0.0
    %141 = vmatprep.subr.mxu0 0.0
    %142 = vmatpush1.msra.mxu0 0.0
    %143 = vmatprep.subr.mxu0 0.0
    %144 = vmatpush1.msra.mxu0 0.0
    %145 = vmatprep.subr.mxu0 0.0
    %146 = vmatpush1.msra.mxu0 0.0
    %147 = vmatprep.subr.mxu0 0.0
    %148 = vmatpush1.msra.mxu0 0.0
    %149 = vmatprep.subr.mxu0 0.0
    %150 = vmatpush1.msra.mxu0 0.0
    %151 = vmatprep.subr.mxu0 0.0
    %152 = vmatpush1.msra.mxu0 0.0
    %153 = vmatprep.subr.mxu0 0.0
    %154 = vmatpush1.msra.mxu0 0.0
    %155 = vmatprep.subr.mxu0 0.0
    %156 = vmatpush1.msra.mxu0 0.0
    %157 = vmatprep.subr.mxu0 0.0
    %158 = vmatpush1.msra.mxu0 0.0
    %159 = vmatprep.subr.mxu0 0.0
    %160 = vmatpush1.msra.mxu0 0.0
    %161 = vmatprep.subr.mxu0 0.0
    %162 = vmatpush1.msra.mxu0 0.0
    %163 = vmatprep.subr.mxu0 0.0
    %164 = vmatpush1.msra.mxu0 0.0
    %165 = vmatprep.subr.mxu0 0.0
    %166 = vmatpush1.msra.mxu0 0.0
    %167 = vmatprep.subr.mxu0 0.0
    %168 = vmatpush1.msra.mxu0 0.0
    %169 = vmatprep.subr.mxu0 0.0
    %170 = vmatpush1.msra.mxu0 0.0
    %171 = vmatprep.subr.mxu0 0.0
    %172 = vmatpush1.msra.mxu0 0.0
    %173 = vmatprep.subr.mxu0 0.0
    %174 = vmatpush1.msra.mxu0 0.0
    %175 = vmatprep.subr.mxu0 0.0
    %176 = vmatpush1.msra.mxu0 0.0
    %177 = vmatprep.subr.mxu0 0.0
    %178 = vmatpush1.msra.mxu0 0.0
    %179 = vmatprep.mubr.f32.mxu0 0.0
    %180 = vmatmul.mubr.f32.gmra.mrb[0].mxu0 %v110
    %v181 = vpop.f32.mrb[0].mxu0
    %v182 = vadd.f32 %v108, %v181
    %v183 = vpop.f32.mrb[0].mxu0
    %184 = vmatprep.mubr.f32.mxu0 0.0
    %185 = vmatmul.mubr.f32.gmra.mrb[0].mxu0 %v113
    %v186 = vpop.f32.mrb[0].mxu0
    %v187 = vadd.f32 %v108, %v186
    %v188 = vpop.f32.mrb[0].mxu0
    %189 = vdwg.mxu0
    %191 = vrot.lane.b32.xlu0 %v182, 96
    %v192 = vpop.permute.xlu0 %191
    %vm193 = vcmask 64512
    %v194 = vsel %vm193, %v182, 0
    %v196 = vsel %vm193, %v192, 0
    %198 = vmatprep.subr.mxu0 0.0
    %199 = vmatpush1.xpose.msra.mxu0 %v196
    %200 = vmatprep.subr.mxu0 0.0
    %201 = vmatpush1.xpose.msra.mxu0 0.0
    %202 = vmatprep.subr.mxu0 0.0
    %203 = vmatpush1.xpose.msra.mxu0 0.0
    %204 = vmatprep.subr.mxu0 0.0
    %205 = vmatpush1.xpose.msra.mxu0 0.0
    %206 = vmatprep.subr.mxu0 0.0
    %207 = vmatpush1.xpose.msra.mxu0 0.0
    %208 = vmatprep.subr.mxu0 0.0
    %209 = vmatpush1.xpose.msra.mxu0 0.0
    %210 = vmatprep.subr.mxu0 0.0
    %211 = vmatpush1.xpose.msra.mxu0 0.0
    %212 = vmatprep.subr.mxu0 0.0
    %213 = vmatpush1.xpose.msra.mxu0 0.0
    %214 = vmatprep.subr.mxu0 0.0
    %215 = vmatpush1.xpose.msra.mxu0 0.0
    %216 = vmatprep.subr.mxu0 0.0
    %217 = vmatpush1.xpose.msra.mxu0 0.0
    %218 = vmatprep.subr.mxu0 0.0
    %219 = vmatpush1.xpose.msra.mxu0 0.0
    %220 = vmatprep.subr.mxu0 0.0
    %221 = vmatpush1.xpose.msra.mxu0 0.0
    %222 = vmatprep.subr.mxu0 0.0
    %223 = vmatpush1.xpose.msra.mxu0 0.0
    %224 = vmatprep.subr.mxu0 0.0
    %225 = vmatpush1.xpose.msra.mxu0 0.0
    %226 = vmatprep.subr.mxu0 0.0
    %227 = vmatpush1.xpose.msra.mxu0 0.0
    %228 = vmatprep.subr.mxu0 0.0
    %229 = vmatpush1.xpose.msra.mxu0 0.0
    %230 = vmatprep.subr.mxu0 0.0
    %231 = vmatpush1.xpose.msra.mxu0 0.0
    %232 = vmatprep.subr.mxu0 0.0
    %233 = vmatpush1.xpose.msra.mxu0 0.0
    %234 = vmatprep.subr.mxu0 0.0
    %235 = vmatpush1.xpose.msra.mxu0 0.0
    %236 = vmatprep.subr.mxu0 0.0
    %237 = vmatpush1.xpose.msra.mxu0 0.0
    %238 = vmatprep.subr.mxu0 0.0
    %239 = vmatpush1.xpose.msra.mxu0 0.0
    %240 = vmatprep.subr.mxu0 0.0
    %241 = vmatpush1.xpose.msra.mxu0 0.0
    %242 = vmatprep.subr.mxu0 0.0
    %243 = vmatpush1.xpose.msra.mxu0 0.0
    %244 = vmatprep.subr.mxu0 0.0
    %245 = vmatpush1.xpose.msra.mxu0 0.0
    %246 = vmatprep.subr.mxu0 0.0
    %247 = vmatpush1.xpose.msra.mxu0 0.0
    %248 = vmatprep.subr.mxu0 0.0
    %249 = vmatpush1.xpose.msra.mxu0 0.0
    %250 = vmatprep.subr.mxu0 0.0
    %251 = vmatpush1.xpose.msra.mxu0 0.0
    %252 = vmatprep.subr.mxu0 0.0
    %253 = vmatpush1.xpose.msra.mxu0 0.0
    %254 = vmatprep.subr.mxu0 0.0
    %255 = vmatpush1.xpose.msra.mxu0 0.0
    %256 = vmatprep.subr.mxu0 0.0
    %257 = vmatpush1.xpose.msra.mxu0 0.0
    %258 = vmatprep.subr.mxu0 0.0
    %259 = vmatpush1.xpose.msra.mxu0 0.0
    %260 = vmatprep.subr.mxu0 0.0
    %261 = vmatpush1.xpose.msra.mxu0 0.0
    %262 = vmatprep.mubr.f32.mxu0 0.0
    %263 = vmatmul.mubr.f32.gmra.mrb[0].mxu0 %v194
    %v264 = vpop.f32.mrb[0].mxu0
    %v265 = vadd.f32 0.0, %v264
    %v266 = vpop.f32.mrb[0].mxu0
    %267 = vdwg.mxu0
    %269 = vrot.lane.b32.xlu0 %v187, 96
    %v270 = vpop.permute.xlu0 %269
    %v271 = vsel %vm193, %v187, 0
    %v273 = vsel %vm193, %v270, 0
    %275 = vmatprep.subr.mxu0 0.0
    %276 = vmatpush1.xpose.msra.mxu0 %v273
    %277 = vmatprep.subr.mxu0 0.0
    %278 = vmatpush1.xpose.msra.mxu0 0.0
    %279 = vmatprep.subr.mxu0 0.0
    %280 = vmatpush1.xpose.msra.mxu0 0.0
    %281 = vmatprep.subr.mxu0 0.0
    %282 = vmatpush1.xpose.msra.mxu0 0.0
    %283 = vmatprep.subr.mxu0 0.0
    %284 = vmatpush1.xpose.msra.mxu0 0.0
    %285 = vmatprep.subr.mxu0 0.0
    %286 = vmatpush1.xpose.msra.mxu0 0.0
    %287 = vmatprep.subr.mxu0 0.0
    %288 = vmatpush1.xpose.msra.mxu0 0.0
    %289 = vmatprep.subr.mxu0 0.0
    %290 = vmatpush1.xpose.msra.mxu0 0.0
    %291 = vmatprep.subr.mxu0 0.0
    %292 = vmatpush1.xpose.msra.mxu0 0.0
    %293 = vmatprep.subr.mxu0 0.0
    %294 = vmatpush1.xpose.msra.mxu0 0.0
    %295 = vmatprep.subr.mxu0 0.0
    %296 = vmatpush1.xpose.msra.mxu0 0.0
    %297 = vmatprep.subr.mxu0 0.0
    %298 = vmatpush1.xpose.msra.mxu0 0.0
    %299 = vmatprep.subr.mxu0 0.0
    %300 = vmatpush1.xpose.msra.mxu0 0.0
    %301 = vmatprep.subr.mxu0 0.0
    %302 = vmatpush1.xpose.msra.mxu0 0.0
    %303 = vmatprep.subr.mxu0 0.0
    %304 = vmatpush1.xpose.msra.mxu0 0.0
    %305 = vmatprep.subr.mxu0 0.0
    %306 = vmatpush1.xpose.msra.mxu0 0.0
    %307 = vmatprep.subr.mxu0 0.0
    %308 = vmatpush1.xpose.msra.mxu0 0.0
    %309 = vmatprep.subr.mxu0 0.0
    %310 = vmatpush1.xpose.msra.mxu0 0.0
    %311 = vmatprep.subr.mxu0 0.0
    %312 = vmatpush1.xpose.msra.mxu0 0.0
    %313 = vmatprep.subr.mxu0 0.0
    %314 = vmatpush1.xpose.msra.mxu0 0.0
    %315 = vmatprep.subr.mxu0 0.0
    %316 = vmatpush1.xpose.msra.mxu0 0.0
    %317 = vmatprep.subr.mxu0 0.0
    %318 = vmatpush1.xpose.msra.mxu0 0.0
    %319 = vmatprep.subr.mxu0 0.0
    %320 = vmatpush1.xpose.msra.mxu0 0.0
    %321 = vmatprep.subr.mxu0 0.0
    %322 = vmatpush1.xpose.msra.mxu0 0.0
    %323 = vmatprep.subr.mxu0 0.0
    %324 = vmatpush1.xpose.msra.mxu0 0.0
    %325 = vmatprep.subr.mxu0 0.0
    %326 = vmatpush1.xpose.msra.mxu0 0.0
    %327 = vmatprep.subr.mxu0 0.0
    %328 = vmatpush1.xpose.msra.mxu0 0.0
    %329 = vmatprep.subr.mxu0 0.0
    %330 = vmatpush1.xpose.msra.mxu0 0.0
    %331 = vmatprep.subr.mxu0 0.0
    %332 = vmatpush1.xpose.msra.mxu0 0.0
    %333 = vmatprep.subr.mxu0 0.0
    %334 = vmatpush1.xpose.msra.mxu0 0.0
    %335 = vmatprep.subr.mxu0 0.0
    %336 = vmatpush1.xpose.msra.mxu0 0.0
    %337 = vmatprep.subr.mxu0 0.0
    %338 = vmatpush1.xpose.msra.mxu0 0.0
    %339 = vmatprep.mubr.f32.mxu0 0.0
    %340 = vmatmul.mubr.f32.gmra.mrb[0].mxu0 %v271
    %v341 = vpop.f32.mrb[0].mxu0
    %v342 = vadd.f32 0.0, %v341
    %v343 = vpop.f32.mrb[0].mxu0
    %344 = vdwg.mxu0
    %345 = vrot.lane.b32.xlu0 %v182, 120
    %v346 = vpop.permute.xlu0 %345
    %347 = vrot.lane.b32.xlu0 %v182, 88
    %v348 = vpop.permute.xlu0 %347
    %v349 = vsel %vm193, %v346, 0
    %v351 = vsel %vm193, %v348, 0
    %353 = vmatprep.subr.mxu0 0.0
    %354 = vmatpush1.xpose.msra.mxu0 %v351
    %355 = vmatprep.subr.mxu0 0.0
    %356 = vmatpush1.xpose.msra.mxu0 0.0
    %357 = vmatprep.subr.mxu0 0.0
    %358 = vmatpush1.xpose.msra.mxu0 0.0
    %359 = vmatprep.subr.mxu0 0.0
    %360 = vmatpush1.xpose.msra.mxu0 0.0
    %361 = vmatprep.subr.mxu0 0.0
    %362 = vmatpush1.xpose.msra.mxu0 0.0
    %363 = vmatprep.subr.mxu0 0.0
    %364 = vmatpush1.xpose.msra.mxu0 0.0
    %365 = vmatprep.subr.mxu0 0.0
    %366 = vmatpush1.xpose.msra.mxu0 0.0
    %367 = vmatprep.subr.mxu0 0.0
    %368 = vmatpush1.xpose.msra.mxu0 0.0
    %369 = vmatprep.subr.mxu0 0.0
    %370 = vmatpush1.xpose.msra.mxu0 0.0
    %371 = vmatprep.subr.mxu0 0.0
    %372 = vmatpush1.xpose.msra.mxu0 0.0
    %373 = vmatprep.subr.mxu0 0.0
    %374 = vmatpush1.xpose.msra.mxu0 0.0
    %375 = vmatprep.subr.mxu0 0.0
    %376 = vmatpush1.xpose.msra.mxu0 0.0
    %377 = vmatprep.subr.mxu0 0.0
    %378 = vmatpush1.xpose.msra.mxu0 0.0
    %379 = vmatprep.subr.mxu0 0.0
    %380 = vmatpush1.xpose.msra.mxu0 0.0
    %381 = vmatprep.subr.mxu0 0.0
    %382 = vmatpush1.xpose.msra.mxu0 0.0
    %383 = vmatprep.subr.mxu0 0.0
    %384 = vmatpush1.xpose.msra.mxu0 0.0
    %385 = vmatprep.subr.mxu0 0.0
    %386 = vmatpush1.xpose.msra.mxu0 0.0
    %387 = vmatprep.subr.mxu0 0.0
    %388 = vmatpush1.xpose.msra.mxu0 0.0
    %389 = vmatprep.subr.mxu0 0.0
    %390 = vmatpush1.xpose.msra.mxu0 0.0
    %391 = vmatprep.subr.mxu0 0.0
    %392 = vmatpush1.xpose.msra.mxu0 0.0
    %393 = vmatprep.subr.mxu0 0.0
    %394 = vmatpush1.xpose.msra.mxu0 0.0
    %395 = vmatprep.subr.mxu0 0.0
    %396 = vmatpush1.xpose.msra.mxu0 0.0
    %397 = vmatprep.subr.mxu0 0.0
    %398 = vmatpush1.xpose.msra.mxu0 0.0
    %399 = vmatprep.subr.mxu0 0.0
    %400 = vmatpush1.xpose.msra.mxu0 0.0
    %401 = vmatprep.subr.mxu0 0.0
    %402 = vmatpush1.xpose.msra.mxu0 0.0
    %403 = vmatprep.subr.mxu0 0.0
    %404 = vmatpush1.xpose.msra.mxu0 0.0
    %405 = vmatprep.subr.mxu0 0.0
    %406 = vmatpush1.xpose.msra.mxu0 0.0
    %407 = vmatprep.subr.mxu0 0.0
    %408 = vmatpush1.xpose.msra.mxu0 0.0
    %409 = vmatprep.subr.mxu0 0.0
    %410 = vmatpush1.xpose.msra.mxu0 0.0
    %411 = vmatprep.subr.mxu0 0.0
    %412 = vmatpush1.xpose.msra.mxu0 0.0
    %413 = vmatprep.subr.mxu0 0.0
    %414 = vmatpush1.xpose.msra.mxu0 0.0
    %415 = vmatprep.subr.mxu0 0.0
    %416 = vmatpush1.xpose.msra.mxu0 0.0
    %417 = vmatprep.mubr.f32.mxu0 0.0
    %418 = vmatmul.mubr.f32.gmra.mrb[0].mxu0 %v349
    %v419 = vpop.f32.mrb[0].mxu0
    %v420 = vadd.f32 0.0, %v419
    %v421 = vpop.f32.mrb[0].mxu0
    %422 = vdwg.mxu0
    %423 = vrot.lane.b32.xlu0 %v187, 120
    %v424 = vpop.permute.xlu0 %423
    %425 = vrot.lane.b32.xlu0 %v187, 88
    %v426 = vpop.permute.xlu0 %425
    %v427 = vsel %vm193, %v424, 0
    %v429 = vsel %vm193, %v426, 0
    %431 = vmatprep.subr.mxu0 0.0
    %432 = vmatpush1.xpose.msra.mxu0 %v429
    %433 = vmatprep.subr.mxu0 0.0
    %434 = vmatpush1.xpose.msra.mxu0 0.0
    %435 = vmatprep.subr.mxu0 0.0
    %436 = vmatpush1.xpose.msra.mxu0 0.0
    %437 = vmatprep.subr.mxu0 0.0
    %438 = vmatpush1.xpose.msra.mxu0 0.0
    %439 = vmatprep.subr.mxu0 0.0
    %440 = vmatpush1.xpose.msra.mxu0 0.0
    %441 = vmatprep.subr.mxu0 0.0
    %442 = vmatpush1.xpose.msra.mxu0 0.0
    %443 = vmatprep.subr.mxu0 0.0
    %444 = vmatpush1.xpose.msra.mxu0 0.0
    %445 = vmatprep.subr.mxu0 0.0
    %446 = vmatpush1.xpose.msra.mxu0 0.0
    %447 = vmatprep.subr.mxu0 0.0
    %448 = vmatpush1.xpose.msra.mxu0 0.0
    %449 = vmatprep.subr.mxu0 0.0
    %450 = vmatpush1.xpose.msra.mxu0 0.0
    %451 = vmatprep.subr.mxu0 0.0
    %452 = vmatpush1.xpose.msra.mxu0 0.0
    %453 = vmatprep.subr.mxu0 0.0
    %454 = vmatpush1.xpose.msra.mxu0 0.0
    %455 = vmatprep.subr.mxu0 0.0
    %456 = vmatpush1.xpose.msra.mxu0 0.0
    %457 = vmatprep.subr.mxu0 0.0
    %458 = vmatpush1.xpose.msra.mxu0 0.0
    %459 = vmatprep.subr.mxu0 0.0
    %460 = vmatpush1.xpose.msra.mxu0 0.0
    %461 = vmatprep.subr.mxu0 0.0
    %462 = vmatpush1.xpose.msra.mxu0 0.0
    %463 = vmatprep.subr.mxu0 0.0
    %464 = vmatpush1.xpose.msra.mxu0 0.0
    %465 = vmatprep.subr.mxu0 0.0
    %466 = vmatpush1.xpose.msra.mxu0 0.0
    %467 = vmatprep.subr.mxu0 0.0
    %468 = vmatpush1.xpose.msra.mxu0 0.0
    %469 = vmatprep.subr.mxu0 0.0
    %470 = vmatpush1.xpose.msra.mxu0 0.0
    %471 = vmatprep.subr.mxu0 0.0
    %472 = vmatpush1.xpose.msra.mxu0 0.0
    %473 = vmatprep.subr.mxu0 0.0
    %474 = vmatpush1.xpose.msra.mxu0 0.0
    %475 = vmatprep.subr.mxu0 0.0
    %476 = vmatpush1.xpose.msra.mxu0 0.0
    %477 = vmatprep.subr.mxu0 0.0
    %478 = vmatpush1.xpose.msra.mxu0 0.0
    %479 = vmatprep.subr.mxu0 0.0
    %480 = vmatpush1.xpose.msra.mxu0 0.0
    %481 = vmatprep.subr.mxu0 0.0
    %482 = vmatpush1.xpose.msra.mxu0 0.0
    %483 = vmatprep.subr.mxu0 0.0
    %484 = vmatpush1.xpose.msra.mxu0 0.0
    %485 = vmatprep.subr.mxu0 0.0
    %486 = vmatpush1.xpose.msra.mxu0 0.0
    %487 = vmatprep.subr.mxu0 0.0
    %488 = vmatpush1.xpose.msra.mxu0 0.0
    %489 = vmatprep.subr.mxu0 0.0
    %490 = vmatpush1.xpose.msra.mxu0 0.0
    %491 = vmatprep.subr.mxu0 0.0
    %492 = vmatpush1.xpose.msra.mxu0 0.0
    %493 = vmatprep.subr.mxu0 0.0
    %494 = vmatpush1.xpose.msra.mxu0 0.0
    %495 = vmatprep.mubr.f32.mxu0 0.0
    %496 = vmatmul.mubr.f32.gmra.mrb[0].mxu0 %v427
    %v497 = vpop.f32.mrb[0].mxu0
    %v498 = vadd.f32 0.0, %v497
    %v499 = vpop.f32.mrb[0].mxu0
    %500 = vdwg.mxu0
    %501 = vrot.lane.b32.xlu0 %v182, 112
    %v502 = vpop.permute.xlu0 %501
    %503 = vrot.lane.b32.xlu0 %v182, 80
    %v504 = vpop.permute.xlu0 %503
    %v505 = vsel %vm193, %v502, 0
    %v507 = vsel %vm193, %v504, 0
    %509 = vmatprep.subr.mxu0 0.0
    %510 = vmatpush1.xpose.msra.mxu0 %v507
    %511 = vmatprep.subr.mxu0 0.0
    %512 = vmatpush1.xpose.msra.mxu0 0.0
    %513 = vmatprep.subr.mxu0 0.0
    %514 = vmatpush1.xpose.msra.mxu0 0.0
    %515 = vmatprep.subr.mxu0 0.0
    %516 = vmatpush1.xpose.msra.mxu0 0.0
    %517 = vmatprep.subr.mxu0 0.0
    %518 = vmatpush1.xpose.msra.mxu0 0.0
    %519 = vmatprep.subr.mxu0 0.0
    %520 = vmatpush1.xpose.msra.mxu0 0.0
    %521 = vmatprep.subr.mxu0 0.0
    %522 = vmatpush1.xpose.msra.mxu0 0.0
    %523 = vmatprep.subr.mxu0 0.0
    %524 = vmatpush1.xpose.msra.mxu0 0.0
    %525 = vmatprep.subr.mxu0 0.0
    %526 = vmatpush1.xpose.msra.mxu0 0.0
    %527 = vmatprep.subr.mxu0 0.0
    %528 = vmatpush1.xpose.msra.mxu0 0.0
    %529 = vmatprep.subr.mxu0 0.0
    %530 = vmatpush1.xpose.msra.mxu0 0.0
    %531 = vmatprep.subr.mxu0 0.0
    %532 = vmatpush1.xpose.msra.mxu0 0.0
    %533 = vmatprep.subr.mxu0 0.0
    %534 = vmatpush1.xpose.msra.mxu0 0.0
    %535 = vmatprep.subr.mxu0 0.0
    %536 = vmatpush1.xpose.msra.mxu0 0.0
    %537 = vmatprep.subr.mxu0 0.0
    %538 = vmatpush1.xpose.msra.mxu0 0.0
    %539 = vmatprep.subr.mxu0 0.0
    %540 = vmatpush1.xpose.msra.mxu0 0.0
    %541 = vmatprep.subr.mxu0 0.0
    %542 = vmatpush1.xpose.msra.mxu0 0.0
    %543 = vmatprep.subr.mxu0 0.0
    %544 = vmatpush1.xpose.msra.mxu0 0.0
    %545 = vmatprep.subr.mxu0 0.0
    %546 = vmatpush1.xpose.msra.mxu0 0.0
    %547 = vmatprep.subr.mxu0 0.0
    %548 = vmatpush1.xpose.msra.mxu0 0.0
    %549 = vmatprep.subr.mxu0 0.0
    %550 = vmatpush1.xpose.msra.mxu0 0.0
    %551 = vmatprep.subr.mxu0 0.0
    %552 = vmatpush1.xpose.msra.mxu0 0.0
    %553 = vmatprep.subr.mxu0 0.0
    %554 = vmatpush1.xpose.msra.mxu0 0.0
    %555 = vmatprep.subr.mxu0 0.0
    %556 = vmatpush1.xpose.msra.mxu0 0.0
    %557 = vmatprep.subr.mxu0 0.0
    %558 = vmatpush1.xpose.msra.mxu0 0.0
    %559 = vmatprep.subr.mxu0 0.0
    %560 = vmatpush1.xpose.msra.mxu0 0.0
    %561 = vmatprep.subr.mxu0 0.0
    %562 = vmatpush1.xpose.msra.mxu0 0.0
    %563 = vmatprep.subr.mxu0 0.0
    %564 = vmatpush1.xpose.msra.mxu0 0.0
    %565 = vmatprep.subr.mxu0 0.0
    %566 = vmatpush1.xpose.msra.mxu0 0.0
    %567 = vmatprep.subr.mxu0 0.0
    %568 = vmatpush1.xpose.msra.mxu0 0.0
    %569 = vmatprep.subr.mxu0 0.0
    %570 = vmatpush1.xpose.msra.mxu0 0.0
    %571 = vmatprep.subr.mxu0 0.0
    %572 = vmatpush1.xpose.msra.mxu0 0.0
    %573 = vmatprep.mubr.f32.mxu0 0.0
    %574 = vmatmul.mubr.f32.gmra.mrb[0].mxu0 %v505
    %v575 = vpop.f32.mrb[0].mxu0
    %v576 = vadd.f32 0.0, %v575
    %v577 = vpop.f32.mrb[0].mxu0
    %578 = vdwg.mxu0
    %579 = vrot.lane.b32.xlu0 %v187, 112
    %v580 = vpop.permute.xlu0 %579
    %581 = vrot.lane.b32.xlu0 %v187, 80
    %v582 = vpop.permute.xlu0 %581
    %v583 = vsel %vm193, %v580, 0
    %v585 = vsel %vm193, %v582, 0
    %587 = vmatprep.subr.mxu0 0.0
    %588 = vmatpush1.xpose.msra.mxu0 %v585
    %589 = vmatprep.subr.mxu0 0.0
    %590 = vmatpush1.xpose.msra.mxu0 0.0
    %591 = vmatprep.subr.mxu0 0.0
    %592 = vmatpush1.xpose.msra.mxu0 0.0
    %593 = vmatprep.subr.mxu0 0.0
    %594 = vmatpush1.xpose.msra.mxu0 0.0
    %595 = vmatprep.subr.mxu0 0.0
    %596 = vmatpush1.xpose.msra.mxu0 0.0
    %597 = vmatprep.subr.mxu0 0.0
    %598 = vmatpush1.xpose.msra.mxu0 0.0
    %599 = vmatprep.subr.mxu0 0.0
    %600 = vmatpush1.xpose.msra.mxu0 0.0
    %601 = vmatprep.subr.mxu0 0.0
    %602 = vmatpush1.xpose.msra.mxu0 0.0
    %603 = vmatprep.subr.mxu0 0.0
    %604 = vmatpush1.xpose.msra.mxu0 0.0
    %605 = vmatprep.subr.mxu0 0.0
    %606 = vmatpush1.xpose.msra.mxu0 0.0
    %607 = vmatprep.subr.mxu0 0.0
    %608 = vmatpush1.xpose.msra.mxu0 0.0
    %609 = vmatprep.subr.mxu0 0.0
    %610 = vmatpush1.xpose.msra.mxu0 0.0
    %611 = vmatprep.subr.mxu0 0.0
    %612 = vmatpush1.xpose.msra.mxu0 0.0
    %613 = vmatprep.subr.mxu0 0.0
    %614 = vmatpush1.xpose.msra.mxu0 0.0
    %615 = vmatprep.subr.mxu0 0.0
    %616 = vmatpush1.xpose.msra.mxu0 0.0
    %617 = vmatprep.subr.mxu0 0.0
    %618 = vmatpush1.xpose.msra.mxu0 0.0
    %619 = vmatprep.subr.mxu0 0.0
    %620 = vmatpush1.xpose.msra.mxu0 0.0
    %621 = vmatprep.subr.mxu0 0.0
    %622 = vmatpush1.xpose.msra.mxu0 0.0
    %623 = vmatprep.subr.mxu0 0.0
    %624 = vmatpush1.xpose.msra.mxu0 0.0
    %625 = vmatprep.subr.mxu0 0.0
    %626 = vmatpush1.xpose.msra.mxu0 0.0
    %627 = vmatprep.subr.mxu0 0.0
    %628 = vmatpush1.xpose.msra.mxu0 0.0
    %629 = vmatprep.subr.mxu0 0.0
    %630 = vmatpush1.xpose.msra.mxu0 0.0
    %631 = vmatprep.subr.mxu0 0.0
    %632 = vmatpush1.xpose.msra.mxu0 0.0
    %633 = vmatprep.subr.mxu0 0.0
    %634 = vmatpush1.xpose.msra.mxu0 0.0
    %635 = vmatprep.subr.mxu0 0.0
    %636 = vmatpush1.xpose.msra.mxu0 0.0
    %637 = vmatprep.subr.mxu0 0.0
    %638 = vmatpush1.xpose.msra.mxu0 0.0
    %639 = vmatprep.subr.mxu0 0.0
    %640 = vmatpush1.xpose.msra.mxu0 0.0
    %641 = vmatprep.subr.mxu0 0.0
    %642 = vmatpush1.xpose.msra.mxu0 0.0
    %643 = vmatprep.subr.mxu0 0.0
    %644 = vmatpush1.xpose.msra.mxu0 0.0
    %645 = vmatprep.subr.mxu0 0.0
    %646 = vmatpush1.xpose.msra.mxu0 0.0
    %647 = vmatprep.subr.mxu0 0.0
    %648 = vmatpush1.xpose.msra.mxu0 0.0
    %649 = vmatprep.subr.mxu0 0.0
    %650 = vmatpush1.xpose.msra.mxu0 0.0
    %651 = vmatprep.mubr.f32.mxu0 0.0
    %652 = vmatmul.mubr.f32.gmra.mrb[0].mxu0 %v583
    %v653 = vpop.f32.mrb[0].mxu0
    %v654 = vadd.f32 0.0, %v653
    %v655 = vpop.f32.mrb[0].mxu0
    %656 = vdwg.mxu0
    %657 = vrot.lane.b32.xlu0 %v182, 104
    %v658 = vpop.permute.xlu0 %657
    %659 = vrot.lane.b32.xlu0 %v182, 72
    %v660 = vpop.permute.xlu0 %659
    %v661 = vsel %vm193, %v658, 0
    %v663 = vsel %vm193, %v660, 0
    %665 = vmatprep.subr.mxu0 0.0
    %666 = vmatpush1.xpose.msra.mxu0 %v663
    %667 = vmatprep.subr.mxu0 0.0
    %668 = vmatpush1.xpose.msra.mxu0 0.0
    %669 = vmatprep.subr.mxu0 0.0
    %670 = vmatpush1.xpose.msra.mxu0 0.0
    %671 = vmatprep.subr.mxu0 0.0
    %672 = vmatpush1.xpose.msra.mxu0 0.0
    %673 = vmatprep.subr.mxu0 0.0
    %674 = vmatpush1.xpose.msra.mxu0 0.0
    %675 = vmatprep.subr.mxu0 0.0
    %676 = vmatpush1.xpose.msra.mxu0 0.0
    %677 = vmatprep.subr.mxu0 0.0
    %678 = vmatpush1.xpose.msra.mxu0 0.0
    %679 = vmatprep.subr.mxu0 0.0
    %680 = vmatpush1.xpose.msra.mxu0 0.0
    %681 = vmatprep.subr.mxu0 0.0
    %682 = vmatpush1.xpose.msra.mxu0 0.0
    %683 = vmatprep.subr.mxu0 0.0
    %684 = vmatpush1.xpose.msra.mxu0 0.0
    %685 = vmatprep.subr.mxu0 0.0
    %686 = vmatpush1.xpose.msra.mxu0 0.0
    %687 = vmatprep.subr.mxu0 0.0
    %688 = vmatpush1.xpose.msra.mxu0 0.0
    %689 = vmatprep.subr.mxu0 0.0
    %690 = vmatpush1.xpose.msra.mxu0 0.0
    %691 = vmatprep.subr.mxu0 0.0
    %692 = vmatpush1.xpose.msra.mxu0 0.0
    %693 = vmatprep.subr.mxu0 0.0
    %694 = vmatpush1.xpose.msra.mxu0 0.0
    %695 = vmatprep.subr.mxu0 0.0
    %696 = vmatpush1.xpose.msra.mxu0 0.0
    %697 = vmatprep.subr.mxu0 0.0
    %698 = vmatpush1.xpose.msra.mxu0 0.0
    %699 = vmatprep.subr.mxu0 0.0
    %700 = vmatpush1.xpose.msra.mxu0 0.0
    %701 = vmatprep.subr.mxu0 0.0
    %702 = vmatpush1.xpose.msra.mxu0 0.0
    %703 = vmatprep.subr.mxu0 0.0
    %704 = vmatpush1.xpose.msra.mxu0 0.0
    %705 = vmatprep.subr.mxu0 0.0
    %706 = vmatpush1.xpose.msra.mxu0 0.0
    %707 = vmatprep.subr.mxu0 0.0
    %708 = vmatpush1.xpose.msra.mxu0 0.0
    %709 = vmatprep.subr.mxu0 0.0
    %710 = vmatpush1.xpose.msra.mxu0 0.0
    %711 = vmatprep.subr.mxu0 0.0
    %712 = vmatpush1.xpose.msra.mxu0 0.0
    %713 = vmatprep.subr.mxu0 0.0
    %714 = vmatpush1.xpose.msra.mxu0 0.0
    %715 = vmatprep.subr.mxu0 0.0
    %716 = vmatpush1.xpose.msra.mxu0 0.0
    %717 = vmatprep.subr.mxu0 0.0
    %718 = vmatpush1.xpose.msra.mxu0 0.0
    %719 = vmatprep.subr.mxu0 0.0
    %720 = vmatpush1.xpose.msra.mxu0 0.0
    %721 = vmatprep.subr.mxu0 0.0
    %722 = vmatpush1.xpose.msra.mxu0 0.0
    %723 = vmatprep.subr.mxu0 0.0
    %724 = vmatpush1.xpose.msra.mxu0 0.0
    %725 = vmatprep.subr.mxu0 0.0
    %726 = vmatpush1.xpose.msra.mxu0 0.0
    %727 = vmatprep.subr.mxu0 0.0
    %728 = vmatpush1.xpose.msra.mxu0 0.0
    %729 = vmatprep.mubr.f32.mxu0 0.0
    %730 = vmatmul.mubr.f32.gmra.mrb[0].mxu0 %v661
    %v731 = vpop.f32.mrb[0].mxu0
    %v732 = vadd.f32 0.0, %v731
    %v733 = vpop.f32.mrb[0].mxu0
    %734 = vdwg.mxu0
    %735 = vrot.lane.b32.xlu0 %v187, 104
    %v736 = vpop.permute.xlu0 %735
    %737 = vrot.lane.b32.xlu0 %v187, 72
    %v738 = vpop.permute.xlu0 %737
    %v739 = vsel %vm193, %v736, 0
    %v741 = vsel %vm193, %v738, 0
    %743 = vmatprep.subr.mxu0 0.0
    %744 = vmatpush1.xpose.msra.mxu0 %v741
    %745 = vmatprep.subr.mxu0 0.0
    %746 = vmatpush1.xpose.msra.mxu0 0.0
    %747 = vmatprep.subr.mxu0 0.0
    %748 = vmatpush1.xpose.msra.mxu0 0.0
    %749 = vmatprep.subr.mxu0 0.0
    %750 = vmatpush1.xpose.msra.mxu0 0.0
    %751 = vmatprep.subr.mxu0 0.0
    %752 = vmatpush1.xpose.msra.mxu0 0.0
    %753 = vmatprep.subr.mxu0 0.0
    %754 = vmatpush1.xpose.msra.mxu0 0.0
    %755 = vmatprep.subr.mxu0 0.0
    %756 = vmatpush1.xpose.msra.mxu0 0.0
    %757 = vmatprep.subr.mxu0 0.0
    %758 = vmatpush1.xpose.msra.mxu0 0.0
    %759 = vmatprep.subr.mxu0 0.0
    %760 = vmatpush1.xpose.msra.mxu0 0.0
    %761 = vmatprep.subr.mxu0 0.0
    %762 = vmatpush1.xpose.msra.mxu0 0.0
    %763 = vmatprep.subr.mxu0 0.0
    %764 = vmatpush1.xpose.msra.mxu0 0.0
    %765 = vmatprep.subr.mxu0 0.0
    %766 = vmatpush1.xpose.msra.mxu0 0.0
    %767 = vmatprep.subr.mxu0 0.0
    %768 = vmatpush1.xpose.msra.mxu0 0.0
    %769 = vmatprep.subr.mxu0 0.0
    %770 = vmatpush1.xpose.msra.mxu0 0.0
    %771 = vmatprep.subr.mxu0 0.0
    %772 = vmatpush1.xpose.msra.mxu0 0.0
    %773 = vmatprep.subr.mxu0 0.0
    %774 = vmatpush1.xpose.msra.mxu0 0.0
    %775 = vmatprep.subr.mxu0 0.0
    %776 = vmatpush1.xpose.msra.mxu0 0.0
    %777 = vmatprep.subr.mxu0 0.0
    %778 = vmatpush1.xpose.msra.mxu0 0.0
    %779 = vmatprep.subr.mxu0 0.0
    %780 = vmatpush1.xpose.msra.mxu0 0.0
    %781 = vmatprep.subr.mxu0 0.0
    %782 = vmatpush1.xpose.msra.mxu0 0.0
    %783 = vmatprep.subr.mxu0 0.0
    %784 = vmatpush1.xpose.msra.mxu0 0.0
    %785 = vmatprep.subr.mxu0 0.0
    %786 = vmatpush1.xpose.msra.mxu0 0.0
    %787 = vmatprep.subr.mxu0 0.0
    %788 = vmatpush1.xpose.msra.mxu0 0.0
    %789 = vmatprep.subr.mxu0 0.0
    %790 = vmatpush1.xpose.msra.mxu0 0.0
    %791 = vmatprep.subr.mxu0 0.0
    %792 = vmatpush1.xpose.msra.mxu0 0.0
    %793 = vmatprep.subr.mxu0 0.0
    %794 = vmatpush1.xpose.msra.mxu0 0.0
    %795 = vmatprep.subr.mxu0 0.0
    %796 = vmatpush1.xpose.msra.mxu0 0.0
    %797 = vmatprep.subr.mxu0 0.0
    %798 = vmatpush1.xpose.msra.mxu0 0.0
    %799 = vmatprep.subr.mxu0 0.0
    %800 = vmatpush1.xpose.msra.mxu0 0.0
    %801 = vmatprep.subr.mxu0 0.0
    %802 = vmatpush1.xpose.msra.mxu0 0.0
    %803 = vmatprep.subr.mxu0 0.0
    %804 = vmatpush1.xpose.msra.mxu0 0.0
    %805 = vmatprep.subr.mxu0 0.0
    %806 = vmatpush1.xpose.msra.mxu0 0.0
    %807 = vmatprep.mubr.f32.mxu0 0.0
    %808 = vmatmul.mubr.f32.gmra.mrb[0].mxu0 %v739
    %v809 = vpop.f32.mrb[0].mxu0
    %v810 = vadd.f32 0.0, %v809
    %v811 = vpop.f32.mrb[0].mxu0
    %812 = vdwg.mxu0
    %v813 = vsel %vm193, %v265, -inf
    %814 = vmax.xlane.f32.xlu0 %v813
    %v815 = vpop.xlane.xlu0 %814
    %v816 = vsel %vm193, %v342, -inf
    %817 = vmax.xlane.f32.xlu0 %v816
    %v818 = vpop.xlane.xlu0 %817
    %v819 = vsel %vm193, %v420, -inf
    %820 = vmax.xlane.f32.xlu0 %v819
    %v821 = vpop.xlane.xlu0 %820
    %v822 = vsel %vm193, %v498, -inf
    %823 = vmax.xlane.f32.xlu0 %v822
    %v824 = vpop.xlane.xlu0 %823
    %v825 = vsel %vm193, %v576, -inf
    %826 = vmax.xlane.f32.xlu0 %v825
    %v827 = vpop.xlane.xlu0 %826
    %v828 = vsel %vm193, %v654, -inf
    %829 = vmax.xlane.f32.xlu0 %v828
    %v830 = vpop.xlane.xlu0 %829
    %v831 = vsel %vm193, %v732, -inf
    %832 = vmax.xlane.f32.xlu0 %v831
    %v833 = vpop.xlane.xlu0 %832
    %v834 = vsel %vm193, %v810, -inf
    %835 = vmax.xlane.f32.xlu0 %v834
    %v836 = vpop.xlane.xlu0 %835
    %v837 = vsub.f32 %v265, %v815
    %v838 = vsub.f32 %v342, %v818
    %v839 = vsub.f32 %v420, %v821
    %v840 = vsub.f32 %v498, %v824
    %v841 = vsub.f32 %v576, %v827
    %v842 = vsub.f32 %v654, %v830
    %v843 = vsub.f32 %v732, %v833
    %v844 = vsub.f32 %v810, %v836
    %v845 = vmul.f32 %v837, 1.442695
    %v846 = vpow.pop %v845
    %v847 = vmul.f32 %v838, 1.442695
    %v848 = vpow.pop %v847
    %v849 = vmul.f32 %v839, 1.442695
    %v850 = vpow.pop %v849
    %v851 = vmul.f32 %v840, 1.442695
    %v852 = vpow.pop %v851
    %v853 = vmul.f32 %v841, 1.442695
    %v854 = vpow.pop %v853
    %v855 = vmul.f32 %v842, 1.442695
    %v856 = vpow.pop %v855
    %v857 = vmul.f32 %v843, 1.442695
    %v858 = vpow.pop %v857
    %v859 = vmul.f32 %v844, 1.442695
    %v860 = vpow.pop %v859
    %v861 = vsel %vm193, %v846, 0.0
    %862 = vadd.xlane.f32.xlu0 %v861
    %v863 = vpop.xlane.xlu0 %862
    %v864 = vsel %vm193, %v848, 0.0
    %865 = vadd.xlane.f32.xlu0 %v864
    %v866 = vpop.xlane.xlu0 %865
    %v867 = vsel %vm193, %v850, 0.0
    %868 = vadd.xlane.f32.xlu0 %v867
    %v869 = vpop.xlane.xlu0 %868
    %v870 = vsel %vm193, %v852, 0.0
    %871 = vadd.xlane.f32.xlu0 %v870
    %v872 = vpop.xlane.xlu0 %871
    %v873 = vsel %vm193, %v854, 0.0
    %874 = vadd.xlane.f32.xlu0 %v873
    %v875 = vpop.xlane.xlu0 %874
    %v876 = vsel %vm193, %v856, 0.0
    %877 = vadd.xlane.f32.xlu0 %v876
    %v878 = vpop.xlane.xlu0 %877
    %v879 = vsel %vm193, %v858, 0.0
    %880 = vadd.xlane.f32.xlu0 %v879
    %v881 = vpop.xlane.xlu0 %880
    %v882 = vsel %vm193, %v860, 0.0
    %883 = vadd.xlane.f32.xlu0 %v882
    %v884 = vpop.xlane.xlu0 %883
    %v885 = vrcp.pop %v863
    %v886 = vrcp.pop %v866
    %v887 = vrcp.pop %v869
    %v888 = vrcp.pop %v872
    %v889 = vrcp.pop %v875
    %v890 = vrcp.pop %v878
    %v891 = vrcp.pop %v881
    %v892 = vrcp.pop %v884
    %v893 = vmul.f32 %v846, %v885
    %v894 = vmul.f32 %v848, %v886
    %v895 = vmul.f32 %v850, %v887
    %v896 = vmul.f32 %v852, %v888
    %v897 = vmul.f32 %v854, %v889
    %v898 = vmul.f32 %v856, %v890
    %v899 = vmul.f32 %v858, %v891
    %v900 = vmul.f32 %v860, %v892
    %901 = vrot.lane.b32.xlu0 %v182, 64
    %v902 = vpop.permute.xlu0 %901
    %v905 = vsel %vm193, %v893, 0
    %907 = vmatprep.subr.mxu0 0.0
    %908 = vmatpush1.msra.mxu0 %v902
    %909 = vmatprep.subr.mxu0 0.0
    %910 = vmatpush1.msra.mxu0 0.0
    %911 = vmatprep.subr.mxu0 0.0
    %912 = vmatpush1.msra.mxu0 0.0
    %913 = vmatprep.subr.mxu0 0.0
    %914 = vmatpush1.msra.mxu0 0.0
    %915 = vmatprep.subr.mxu0 0.0
    %916 = vmatpush1.msra.mxu0 0.0
    %917 = vmatprep.subr.mxu0 0.0
    %918 = vmatpush1.msra.mxu0 0.0
    %919 = vmatprep.subr.mxu0 0.0
    %920 = vmatpush1.msra.mxu0 0.0
    %921 = vmatprep.subr.mxu0 0.0
    %922 = vmatpush1.msra.mxu0 0.0
    %923 = vmatprep.subr.mxu0 0.0
    %924 = vmatpush1.msra.mxu0 0.0
    %925 = vmatprep.subr.mxu0 0.0
    %926 = vmatpush1.msra.mxu0 0.0
    %927 = vmatprep.subr.mxu0 0.0
    %928 = vmatpush1.msra.mxu0 0.0
    %929 = vmatprep.subr.mxu0 0.0
    %930 = vmatpush1.msra.mxu0 0.0
    %931 = vmatprep.subr.mxu0 0.0
    %932 = vmatpush1.msra.mxu0 0.0
    %933 = vmatprep.subr.mxu0 0.0
    %934 = vmatpush1.msra.mxu0 0.0
    %935 = vmatprep.subr.mxu0 0.0
    %936 = vmatpush1.msra.mxu0 0.0
    %937 = vmatprep.subr.mxu0 0.0
    %938 = vmatpush1.msra.mxu0 0.0
    %939 = vmatprep.subr.mxu0 0.0
    %940 = vmatpush1.msra.mxu0 0.0
    %941 = vmatprep.subr.mxu0 0.0
    %942 = vmatpush1.msra.mxu0 0.0
    %943 = vmatprep.subr.mxu0 0.0
    %944 = vmatpush1.msra.mxu0 0.0
    %945 = vmatprep.subr.mxu0 0.0
    %946 = vmatpush1.msra.mxu0 0.0
    %947 = vmatprep.subr.mxu0 0.0
    %948 = vmatpush1.msra.mxu0 0.0
    %949 = vmatprep.subr.mxu0 0.0
    %950 = vmatpush1.msra.mxu0 0.0
    %951 = vmatprep.subr.mxu0 0.0
    %952 = vmatpush1.msra.mxu0 0.0
    %953 = vmatprep.subr.mxu0 0.0
    %954 = vmatpush1.msra.mxu0 0.0
    %955 = vmatprep.subr.mxu0 0.0
    %956 = vmatpush1.msra.mxu0 0.0
    %957 = vmatprep.subr.mxu0 0.0
    %958 = vmatpush1.msra.mxu0 0.0
    %959 = vmatprep.subr.mxu0 0.0
    %960 = vmatpush1.msra.mxu0 0.0
    %961 = vmatprep.subr.mxu0 0.0
    %962 = vmatpush1.msra.mxu0 0.0
    %963 = vmatprep.subr.mxu0 0.0
    %964 = vmatpush1.msra.mxu0 0.0
    %965 = vmatprep.subr.mxu0 0.0
    %966 = vmatpush1.msra.mxu0 0.0
    %967 = vmatprep.subr.mxu0 0.0
    %968 = vmatpush1.msra.mxu0 0.0
    %969 = vmatprep.subr.mxu0 0.0
    %970 = vmatpush1.msra.mxu0 0.0
    %971 = vmatprep.mubr.f32.mxu0 0.0
    %972 = vmatmul.mubr.f32.gmra.mrb[0].mxu0 %v905
    %v973 = vpop.f32.mrb[0].mxu0
    %v974 = vadd.f32 0.0, %v973
    %v975 = vpop.f32.mrb[0].mxu0
    %976 = vdwg.mxu0
    %977 = vrot.lane.b32.xlu0 %v187, 64
    %v978 = vpop.permute.xlu0 %977
    %v981 = vsel %vm193, %v894, 0
    %983 = vmatprep.subr.mxu0 0.0
    %984 = vmatpush1.msra.mxu0 %v978
    %985 = vmatprep.subr.mxu0 0.0
    %986 = vmatpush1.msra.mxu0 0.0
    %987 = vmatprep.subr.mxu0 0.0
    %988 = vmatpush1.msra.mxu0 0.0
    %989 = vmatprep.subr.mxu0 0.0
    %990 = vmatpush1.msra.mxu0 0.0
    %991 = vmatprep.subr.mxu0 0.0
    %992 = vmatpush1.msra.mxu0 0.0
    %993 = vmatprep.subr.mxu0 0.0
    %994 = vmatpush1.msra.mxu0 0.0
    %995 = vmatprep.subr.mxu0 0.0
    %996 = vmatpush1.msra.mxu0 0.0
    %997 = vmatprep.subr.mxu0 0.0
    %998 = vmatpush1.msra.mxu0 0.0
    %999 = vmatprep.subr.mxu0 0.0
    %1000 = vmatpush1.msra.mxu0 0.0
    %1001 = vmatprep.subr.mxu0 0.0
    %1002 = vmatpush1.msra.mxu0 0.0
    %1003 = vmatprep.subr.mxu0 0.0
    %1004 = vmatpush1.msra.mxu0 0.0
    %1005 = vmatprep.subr.mxu0 0.0
    %1006 = vmatpush1.msra.mxu0 0.0
    %1007 = vmatprep.subr.mxu0 0.0
    %1008 = vmatpush1.msra.mxu0 0.0
    %1009 = vmatprep.subr.mxu0 0.0
    %1010 = vmatpush1.msra.mxu0 0.0
    %1011 = vmatprep.subr.mxu0 0.0
    %1012 = vmatpush1.msra.mxu0 0.0
    %1013 = vmatprep.subr.mxu0 0.0
    %1014 = vmatpush1.msra.mxu0 0.0
    %1015 = vmatprep.subr.mxu0 0.0
    %1016 = vmatpush1.msra.mxu0 0.0
    %1017 = vmatprep.subr.mxu0 0.0
    %1018 = vmatpush1.msra.mxu0 0.0
    %1019 = vmatprep.subr.mxu0 0.0
    %1020 = vmatpush1.msra.mxu0 0.0
    %1021 = vmatprep.subr.mxu0 0.0
    %1022 = vmatpush1.msra.mxu0 0.0
    %1023 = vmatprep.subr.mxu0 0.0
    %1024 = vmatpush1.msra.mxu0 0.0
    %1025 = vmatprep.subr.mxu0 0.0
    %1026 = vmatpush1.msra.mxu0 0.0
    %1027 = vmatprep.subr.mxu0 0.0
    %1028 = vmatpush1.msra.mxu0 0.0
    %1029 = vmatprep.subr.mxu0 0.0
    %1030 = vmatpush1.msra.mxu0 0.0
    %1031 = vmatprep.subr.mxu0 0.0
    %1032 = vmatpush1.msra.mxu0 0.0
    %1033 = vmatprep.subr.mxu0 0.0
    %1034 = vmatpush1.msra.mxu0 0.0
    %1035 = vmatprep.subr.mxu0 0.0
    %1036 = vmatpush1.msra.mxu0 0.0
    %1037 = vmatprep.subr.mxu0 0.0
    %1038 = vmatpush1.msra.mxu0 0.0
    %1039 = vmatprep.subr.mxu0 0.0
    %1040 = vmatpush1.msra.mxu0 0.0
    %1041 = vmatprep.subr.mxu0 0.0
    %1042 = vmatpush1.msra.mxu0 0.0
    %1043 = vmatprep.subr.mxu0 0.0
    %1044 = vmatpush1.msra.mxu0 0.0
    %1045 = vmatprep.subr.mxu0 0.0
    %1046 = vmatpush1.msra.mxu0 0.0
    %1047 = vmatprep.mubr.f32.mxu0 0.0
    %1048 = vmatmul.mubr.f32.gmra.mrb[0].mxu0 %v981
    %v1049 = vpop.f32.mrb[0].mxu0
    %v1050 = vadd.f32 0.0, %v1049
    %v1051 = vpop.f32.mrb[0].mxu0
    %1052 = vdwg.mxu0
    %1053 = vrot.lane.b32.xlu0 %v182, 56
    %v1054 = vpop.permute.xlu0 %1053
    %v1057 = vsel %vm193, %v895, 0
    %1059 = vmatprep.subr.mxu0 0.0
    %1060 = vmatpush1.msra.mxu0 %v1054
    %1061 = vmatprep.subr.mxu0 0.0
    %1062 = vmatpush1.msra.mxu0 0.0
    %1063 = vmatprep.subr.mxu0 0.0
    %1064 = vmatpush1.msra.mxu0 0.0
    %1065 = vmatprep.subr.mxu0 0.0
    %1066 = vmatpush1.msra.mxu0 0.0
    %1067 = vmatprep.subr.mxu0 0.0
    %1068 = vmatpush1.msra.mxu0 0.0
    %1069 = vmatprep.subr.mxu0 0.0
    %1070 = vmatpush1.msra.mxu0 0.0
    %1071 = vmatprep.subr.mxu0 0.0
    %1072 = vmatpush1.msra.mxu0 0.0
    %1073 = vmatprep.subr.mxu0 0.0
    %1074 = vmatpush1.msra.mxu0 0.0
    %1075 = vmatprep.subr.mxu0 0.0
    %1076 = vmatpush1.msra.mxu0 0.0
    %1077 = vmatprep.subr.mxu0 0.0
    %1078 = vmatpush1.msra.mxu0 0.0
    %1079 = vmatprep.subr.mxu0 0.0
    %1080 = vmatpush1.msra.mxu0 0.0
    %1081 = vmatprep.subr.mxu0 0.0
    %1082 = vmatpush1.msra.mxu0 0.0
    %1083 = vmatprep.subr.mxu0 0.0
    %1084 = vmatpush1.msra.mxu0 0.0
    %1085 = vmatprep.subr.mxu0 0.0
    %1086 = vmatpush1.msra.mxu0 0.0
    %1087 = vmatprep.subr.mxu0 0.0
    %1088 = vmatpush1.msra.mxu0 0.0
    %1089 = vmatprep.subr.mxu0 0.0
    %1090 = vmatpush1.msra.mxu0 0.0
    %1091 = vmatprep.subr.mxu0 0.0
    %1092 = vmatpush1.msra.mxu0 0.0
    %1093 = vmatprep.subr.mxu0 0.0
    %1094 = vmatpush1.msra.mxu0 0.0
    %1095 = vmatprep.subr.mxu0 0.0
    %1096 = vmatpush1.msra.mxu0 0.0
    %1097 = vmatprep.subr.mxu0 0.0
    %1098 = vmatpush1.msra.mxu0 0.0
    %1099 = vmatprep.subr.mxu0 0.0
    %1100 = vmatpush1.msra.mxu0 0.0
    %1101 = vmatprep.subr.mxu0 0.0
    %1102 = vmatpush1.msra.mxu0 0.0
    %1103 = vmatprep.subr.mxu0 0.0
    %1104 = vmatpush1.msra.mxu0 0.0
    %1105 = vmatprep.subr.mxu0 0.0
    %1106 = vmatpush1.msra.mxu0 0.0
    %1107 = vmatprep.subr.mxu0 0.0
    %1108 = vmatpush1.msra.mxu0 0.0
    %1109 = vmatprep.subr.mxu0 0.0
    %1110 = vmatpush1.msra.mxu0 0.0
    %1111 = vmatprep.subr.mxu0 0.0
    %1112 = vmatpush1.msra.mxu0 0.0
    %1113 = vmatprep.subr.mxu0 0.0
    %1114 = vmatpush1.msra.mxu0 0.0
    %1115 = vmatprep.subr.mxu0 0.0
    %1116 = vmatpush1.msra.mxu0 0.0
    %1117 = vmatprep.subr.mxu0 0.0
    %1118 = vmatpush1.msra.mxu0 0.0
    %1119 = vmatprep.subr.mxu0 0.0
    %1120 = vmatpush1.msra.mxu0 0.0
    %1121 = vmatprep.subr.mxu0 0.0
    %1122 = vmatpush1.msra.mxu0 0.0
    %1123 = vmatprep.mubr.f32.mxu0 0.0
    %1124 = vmatmul.mubr.f32.gmra.mrb[0].mxu0 %v1057
    %v1125 = vpop.f32.mrb[0].mxu0
    %v1126 = vadd.f32 0.0, %v1125
    %v1127 = vpop.f32.mrb[0].mxu0
    %1128 = vdwg.mxu0
    %1129 = vrot.lane.b32.xlu0 %v187, 56
    %v1130 = vpop.permute.xlu0 %1129
    %v1133 = vsel %vm193, %v896, 0
    %1135 = vmatprep.subr.mxu0 0.0
    %1136 = vmatpush1.msra.mxu0 %v1130
    %1137 = vmatprep.subr.mxu0 0.0
    %1138 = vmatpush1.msra.mxu0 0.0
    %1139 = vmatprep.subr.mxu0 0.0
    %1140 = vmatpush1.msra.mxu0 0.0
    %1141 = vmatprep.subr.mxu0 0.0
    %1142 = vmatpush1.msra.mxu0 0.0
    %1143 = vmatprep.subr.mxu0 0.0
    %1144 = vmatpush1.msra.mxu0 0.0
    %1145 = vmatprep.subr.mxu0 0.0
    %1146 = vmatpush1.msra.mxu0 0.0
    %1147 = vmatprep.subr.mxu0 0.0
    %1148 = vmatpush1.msra.mxu0 0.0
    %1149 = vmatprep.subr.mxu0 0.0
    %1150 = vmatpush1.msra.mxu0 0.0
    %1151 = vmatprep.subr.mxu0 0.0
    %1152 = vmatpush1.msra.mxu0 0.0
    %1153 = vmatprep.subr.mxu0 0.0
    %1154 = vmatpush1.msra.mxu0 0.0
    %1155 = vmatprep.subr.mxu0 0.0
    %1156 = vmatpush1.msra.mxu0 0.0
    %1157 = vmatprep.subr.mxu0 0.0
    %1158 = vmatpush1.msra.mxu0 0.0
    %1159 = vmatprep.subr.mxu0 0.0
    %1160 = vmatpush1.msra.mxu0 0.0
    %1161 = vmatprep.subr.mxu0 0.0
    %1162 = vmatpush1.msra.mxu0 0.0
    %1163 = vmatprep.subr.mxu0 0.0
    %1164 = vmatpush1.msra.mxu0 0.0
    %1165 = vmatprep.subr.mxu0 0.0
    %1166 = vmatpush1.msra.mxu0 0.0
    %1167 = vmatprep.subr.mxu0 0.0
    %1168 = vmatpush1.msra.mxu0 0.0
    %1169 = vmatprep.subr.mxu0 0.0
    %1170 = vmatpush1.msra.mxu0 0.0
    %1171 = vmatprep.subr.mxu0 0.0
    %1172 = vmatpush1.msra.mxu0 0.0
    %1173 = vmatprep.subr.mxu0 0.0
    %1174 = vmatpush1.msra.mxu0 0.0
    %1175 = vmatprep.subr.mxu0 0.0
    %1176 = vmatpush1.msra.mxu0 0.0
    %1177 = vmatprep.subr.mxu0 0.0
    %1178 = vmatpush1.msra.mxu0 0.0
    %1179 = vmatprep.subr.mxu0 0.0
    %1180 = vmatpush1.msra.mxu0 0.0
    %1181 = vmatprep.subr.mxu0 0.0
    %1182 = vmatpush1.msra.mxu0 0.0
    %1183 = vmatprep.subr.mxu0 0.0
    %1184 = vmatpush1.msra.mxu0 0.0
    %1185 = vmatprep.subr.mxu0 0.0
    %1186 = vmatpush1.msra.mxu0 0.0
    %1187 = vmatprep.subr.mxu0 0.0
    %1188 = vmatpush1.msra.mxu0 0.0
    %1189 = vmatprep.subr.mxu0 0.0
    %1190 = vmatpush1.msra.mxu0 0.0
    %1191 = vmatprep.subr.mxu0 0.0
    %1192 = vmatpush1.msra.mxu0 0.0
    %1193 = vmatprep.subr.mxu0 0.0
    %1194 = vmatpush1.msra.mxu0 0.0
    %1195 = vmatprep.subr.mxu0 0.0
    %1196 = vmatpush1.msra.mxu0 0.0
    %1197 = vmatprep.subr.mxu0 0.0
    %1198 = vmatpush1.msra.mxu0 0.0
    %1199 = vmatprep.mubr.f32.mxu0 0.0
    %1200 = vmatmul.mubr.f32.gmra.mrb[0].mxu0 %v1133
    %v1201 = vpop.f32.mrb[0].mxu0
    %v1202 = vadd.f32 0.0, %v1201
    %v1203 = vpop.f32.mrb[0].mxu0
    %1204 = vdwg.mxu0
    %1205 = vrot.lane.b32.xlu0 %v182, 48
    %v1206 = vpop.permute.xlu0 %1205
    %v1209 = vsel %vm193, %v897, 0
    %1211 = vmatprep.subr.mxu0 0.0
    %1212 = vmatpush1.msra.mxu0 %v1206
    %1213 = vmatprep.subr.mxu0 0.0
    %1214 = vmatpush1.msra.mxu0 0.0
    %1215 = vmatprep.subr.mxu0 0.0
    %1216 = vmatpush1.msra.mxu0 0.0
    %1217 = vmatprep.subr.mxu0 0.0
    %1218 = vmatpush1.msra.mxu0 0.0
    %1219 = vmatprep.subr.mxu0 0.0
    %1220 = vmatpush1.msra.mxu0 0.0
    %1221 = vmatprep.subr.mxu0 0.0
    %1222 = vmatpush1.msra.mxu0 0.0
    %1223 = vmatprep.subr.mxu0 0.0
    %1224 = vmatpush1.msra.mxu0 0.0
    %1225 = vmatprep.subr.mxu0 0.0
    %1226 = vmatpush1.msra.mxu0 0.0
    %1227 = vmatprep.subr.mxu0 0.0
    %1228 = vmatpush1.msra.mxu0 0.0
    %1229 = vmatprep.subr.mxu0 0.0
    %1230 = vmatpush1.msra.mxu0 0.0
    %1231 = vmatprep.subr.mxu0 0.0
    %1232 = vmatpush1.msra.mxu0 0.0
    %1233 = vmatprep.subr.mxu0 0.0
    %1234 = vmatpush1.msra.mxu0 0.0
    %1235 = vmatprep.subr.mxu0 0.0
    %1236 = vmatpush1.msra.mxu0 0.0
    %1237 = vmatprep.subr.mxu0 0.0
    %1238 = vmatpush1.msra.mxu0 0.0
    %1239 = vmatprep.subr.mxu0 0.0
    %1240 = vmatpush1.msra.mxu0 0.0
    %1241 = vmatprep.subr.mxu0 0.0
    %1242 = vmatpush1.msra.mxu0 0.0
    %1243 = vmatprep.subr.mxu0 0.0
    %1244 = vmatpush1.msra.mxu0 0.0
    %1245 = vmatprep.subr.mxu0 0.0
    %1246 = vmatpush1.msra.mxu0 0.0
    %1247 = vmatprep.subr.mxu0 0.0
    %1248 = vmatpush1.msra.mxu0 0.0
    %1249 = vmatprep.subr.mxu0 0.0
    %1250 = vmatpush1.msra.mxu0 0.0
    %1251 = vmatprep.subr.mxu0 0.0
    %1252 = vmatpush1.msra.mxu0 0.0
    %1253 = vmatprep.subr.mxu0 0.0
    %1254 = vmatpush1.msra.mxu0 0.0
    %1255 = vmatprep.subr.mxu0 0.0
    %1256 = vmatpush1.msra.mxu0 0.0
    %1257 = vmatprep.subr.mxu0 0.0
    %1258 = vmatpush1.msra.mxu0 0.0
    %1259 = vmatprep.subr.mxu0 0.0
    %1260 = vmatpush1.msra.mxu0 0.0
    %1261 = vmatprep.subr.mxu0 0.0
    %1262 = vmatpush1.msra.mxu0 0.0
    %1263 = vmatprep.subr.mxu0 0.0
    %1264 = vmatpush1.msra.mxu0 0.0
    %1265 = vmatprep.subr.mxu0 0.0
    %1266 = vmatpush1.msra.mxu0 0.0
    %1267 = vmatprep.subr.mxu0 0.0
    %1268 = vmatpush1.msra.mxu0 0.0
    %1269 = vmatprep.subr.mxu0 0.0
    %1270 = vmatpush1.msra.mxu0 0.0
    %1271 = vmatprep.subr.mxu0 0.0
    %1272 = vmatpush1.msra.mxu0 0.0
    %1273 = vmatprep.subr.mxu0 0.0
    %1274 = vmatpush1.msra.mxu0 0.0
    %1275 = vmatprep.mubr.f32.mxu0 0.0
    %1276 = vmatmul.mubr.f32.gmra.mrb[0].mxu0 %v1209
    %v1277 = vpop.f32.mrb[0].mxu0
    %v1278 = vadd.f32 0.0, %v1277
    %v1279 = vpop.f32.mrb[0].mxu0
    %1280 = vdwg.mxu0
    %1281 = vrot.lane.b32.xlu0 %v187, 48
    %v1282 = vpop.permute.xlu0 %1281
    %v1285 = vsel %vm193, %v898, 0
    %1287 = vmatprep.subr.mxu0 0.0
    %1288 = vmatpush1.msra.mxu0 %v1282
    %1289 = vmatprep.subr.mxu0 0.0
    %1290 = vmatpush1.msra.mxu0 0.0
    %1291 = vmatprep.subr.mxu0 0.0
    %1292 = vmatpush1.msra.mxu0 0.0
    %1293 = vmatprep.subr.mxu0 0.0
    %1294 = vmatpush1.msra.mxu0 0.0
    %1295 = vmatprep.subr.mxu0 0.0
    %1296 = vmatpush1.msra.mxu0 0.0
    %1297 = vmatprep.subr.mxu0 0.0
    %1298 = vmatpush1.msra.mxu0 0.0
    %1299 = vmatprep.subr.mxu0 0.0
    %1300 = vmatpush1.msra.mxu0 0.0
    %1301 = vmatprep.subr.mxu0 0.0
    %1302 = vmatpush1.msra.mxu0 0.0
    %1303 = vmatprep.subr.mxu0 0.0
    %1304 = vmatpush1.msra.mxu0 0.0
    %1305 = vmatprep.subr.mxu0 0.0
    %1306 = vmatpush1.msra.mxu0 0.0
    %1307 = vmatprep.subr.mxu0 0.0
    %1308 = vmatpush1.msra.mxu0 0.0
    %1309 = vmatprep.subr.mxu0 0.0
    %1310 = vmatpush1.msra.mxu0 0.0
    %1311 = vmatprep.subr.mxu0 0.0
    %1312 = vmatpush1.msra.mxu0 0.0
    %1313 = vmatprep.subr.mxu0 0.0
    %1314 = vmatpush1.msra.mxu0 0.0
    %1315 = vmatprep.subr.mxu0 0.0
    %1316 = vmatpush1.msra.mxu0 0.0
    %1317 = vmatprep.subr.mxu0 0.0
    %1318 = vmatpush1.msra.mxu0 0.0
    %1319 = vmatprep.subr.mxu0 0.0
    %1320 = vmatpush1.msra.mxu0 0.0
    %1321 = vmatprep.subr.mxu0 0.0
    %1322 = vmatpush1.msra.mxu0 0.0
    %1323 = vmatprep.subr.mxu0 0.0
    %1324 = vmatpush1.msra.mxu0 0.0
    %1325 = vmatprep.subr.mxu0 0.0
    %1326 = vmatpush1.msra.mxu0 0.0
    %1327 = vmatprep.subr.mxu0 0.0
    %1328 = vmatpush1.msra.mxu0 0.0
    %1329 = vmatprep.subr.mxu0 0.0
    %1330 = vmatpush1.msra.mxu0 0.0
    %1331 = vmatprep.subr.mxu0 0.0
    %1332 = vmatpush1.msra.mxu0 0.0
    %1333 = vmatprep.subr.mxu0 0.0
    %1334 = vmatpush1.msra.mxu0 0.0
    %1335 = vmatprep.subr.mxu0 0.0
    %1336 = vmatpush1.msra.mxu0 0.0
    %1337 = vmatprep.subr.mxu0 0.0
    %1338 = vmatpush1.msra.mxu0 0.0
    %1339 = vmatprep.subr.mxu0 0.0
    %1340 = vmatpush1.msra.mxu0 0.0
    %1341 = vmatprep.subr.mxu0 0.0
    %1342 = vmatpush1.msra.mxu0 0.0
    %1343 = vmatprep.subr.mxu0 0.0
    %1344 = vmatpush1.msra.mxu0 0.0
    %1345 = vmatprep.subr.mxu0 0.0
    %1346 = vmatpush1.msra.mxu0 0.0
    %1347 = vmatprep.subr.mxu0 0.0
    %1348 = vmatpush1.msra.mxu0 0.0
    %1349 = vmatprep.subr.mxu0 0.0
    %1350 = vmatpush1.msra.mxu0 0.0
    %1351 = vmatprep.mubr.f32.mxu0 0.0
    %1352 = vmatmul.mubr.f32.gmra.mrb[0].mxu0 %v1285
    %v1353 = vpop.f32.mrb[0].mxu0
    %v1354 = vadd.f32 0.0, %v1353
    %v1355 = vpop.f32.mrb[0].mxu0
    %1356 = vdwg.mxu0
    %1357 = vrot.lane.b32.xlu0 %v182, 40
    %v1358 = vpop.permute.xlu0 %1357
    %v1361 = vsel %vm193, %v899, 0
    %1363 = vmatprep.subr.mxu0 0.0
    %1364 = vmatpush1.msra.mxu0 %v1358
    %1365 = vmatprep.subr.mxu0 0.0
    %1366 = vmatpush1.msra.mxu0 0.0
    %1367 = vmatprep.subr.mxu0 0.0
    %1368 = vmatpush1.msra.mxu0 0.0
    %1369 = vmatprep.subr.mxu0 0.0
    %1370 = vmatpush1.msra.mxu0 0.0
    %1371 = vmatprep.subr.mxu0 0.0
    %1372 = vmatpush1.msra.mxu0 0.0
    %1373 = vmatprep.subr.mxu0 0.0
    %1374 = vmatpush1.msra.mxu0 0.0
    %1375 = vmatprep.subr.mxu0 0.0
    %1376 = vmatpush1.msra.mxu0 0.0
    %1377 = vmatprep.subr.mxu0 0.0
    %1378 = vmatpush1.msra.mxu0 0.0
    %1379 = vmatprep.subr.mxu0 0.0
    %1380 = vmatpush1.msra.mxu0 0.0
    %1381 = vmatprep.subr.mxu0 0.0
    %1382 = vmatpush1.msra.mxu0 0.0
    %1383 = vmatprep.subr.mxu0 0.0
    %1384 = vmatpush1.msra.mxu0 0.0
    %1385 = vmatprep.subr.mxu0 0.0
    %1386 = vmatpush1.msra.mxu0 0.0
    %1387 = vmatprep.subr.mxu0 0.0
    %1388 = vmatpush1.msra.mxu0 0.0
    %1389 = vmatprep.subr.mxu0 0.0
    %1390 = vmatpush1.msra.mxu0 0.0
    %1391 = vmatprep.subr.mxu0 0.0
    %1392 = vmatpush1.msra.mxu0 0.0
    %1393 = vmatprep.subr.mxu0 0.0
    %1394 = vmatpush1.msra.mxu0 0.0
    %1395 = vmatprep.subr.mxu0 0.0
    %1396 = vmatpush1.msra.mxu0 0.0
    %1397 = vmatprep.subr.mxu0 0.0
    %1398 = vmatpush1.msra.mxu0 0.0
    %1399 = vmatprep.subr.mxu0 0.0
    %1400 = vmatpush1.msra.mxu0 0.0
    %1401 = vmatprep.subr.mxu0 0.0
    %1402 = vmatpush1.msra.mxu0 0.0
    %1403 = vmatprep.subr.mxu0 0.0
    %1404 = vmatpush1.msra.mxu0 0.0
    %1405 = vmatprep.subr.mxu0 0.0
    %1406 = vmatpush1.msra.mxu0 0.0
    %1407 = vmatprep.subr.mxu0 0.0
    %1408 = vmatpush1.msra.mxu0 0.0
    %1409 = vmatprep.subr.mxu0 0.0
    %1410 = vmatpush1.msra.mxu0 0.0
    %1411 = vmatprep.subr.mxu0 0.0
    %1412 = vmatpush1.msra.mxu0 0.0
    %1413 = vmatprep.subr.mxu0 0.0
    %1414 = vmatpush1.msra.mxu0 0.0
    %1415 = vmatprep.subr.mxu0 0.0
    %1416 = vmatpush1.msra.mxu0 0.0
    %1417 = vmatprep.subr.mxu0 0.0
    %1418 = vmatpush1.msra.mxu0 0.0
    %1419 = vmatprep.subr.mxu0 0.0
    %1420 = vmatpush1.msra.mxu0 0.0
    %1421 = vmatprep.subr.mxu0 0.0
    %1422 = vmatpush1.msra.mxu0 0.0
    %1423 = vmatprep.subr.mxu0 0.0
    %1424 = vmatpush1.msra.mxu0 0.0
    %1425 = vmatprep.subr.mxu0 0.0
    %1426 = vmatpush1.msra.mxu0 0.0
    %1427 = vmatprep.mubr.f32.mxu0 0.0
    %1428 = vmatmul.mubr.f32.gmra.mrb[0].mxu0 %v1361
    %v1429 = vpop.f32.mrb[0].mxu0
    %v1430 = vadd.f32 0.0, %v1429
    %v1431 = vpop.f32.mrb[0].mxu0
    %1432 = vdwg.mxu0
    %1433 = vrot.lane.b32.xlu0 %v187, 40
    %v1434 = vpop.permute.xlu0 %1433
    %v1437 = vsel %vm193, %v900, 0
    %1439 = vmatprep.subr.mxu0 0.0
    %1440 = vmatpush1.msra.mxu0 %v1434
    %1441 = vmatprep.subr.mxu0 0.0
    %1442 = vmatpush1.msra.mxu0 0.0
    %1443 = vmatprep.subr.mxu0 0.0
    %1444 = vmatpush1.msra.mxu0 0.0
    %1445 = vmatprep.subr.mxu0 0.0
    %1446 = vmatpush1.msra.mxu0 0.0
    %1447 = vmatprep.subr.mxu0 0.0
    %1448 = vmatpush1.msra.mxu0 0.0
    %1449 = vmatprep.subr.mxu0 0.0
    %1450 = vmatpush1.msra.mxu0 0.0
    %1451 = vmatprep.subr.mxu0 0.0
    %1452 = vmatpush1.msra.mxu0 0.0
    %1453 = vmatprep.subr.mxu0 0.0
    %1454 = vmatpush1.msra.mxu0 0.0
    %1455 = vmatprep.subr.mxu0 0.0
    %1456 = vmatpush1.msra.mxu0 0.0
    %1457 = vmatprep.subr.mxu0 0.0
    %1458 = vmatpush1.msra.mxu0 0.0
    %1459 = vmatprep.subr.mxu0 0.0
    %1460 = vmatpush1.msra.mxu0 0.0
    %1461 = vmatprep.subr.mxu0 0.0
    %1462 = vmatpush1.msra.mxu0 0.0
    %1463 = vmatprep.subr.mxu0 0.0
    %1464 = vmatpush1.msra.mxu0 0.0
    %1465 = vmatprep.subr.mxu0 0.0
    %1466 = vmatpush1.msra.mxu0 0.0
    %1467 = vmatprep.subr.mxu0 0.0
    %1468 = vmatpush1.msra.mxu0 0.0
    %1469 = vmatprep.subr.mxu0 0.0
    %1470 = vmatpush1.msra.mxu0 0.0
    %1471 = vmatprep.subr.mxu0 0.0
    %1472 = vmatpush1.msra.mxu0 0.0
    %1473 = vmatprep.subr.mxu0 0.0
    %1474 = vmatpush1.msra.mxu0 0.0
    %1475 = vmatprep.subr.mxu0 0.0
    %1476 = vmatpush1.msra.mxu0 0.0
    %1477 = vmatprep.subr.mxu0 0.0
    %1478 = vmatpush1.msra.mxu0 0.0
    %1479 = vmatprep.subr.mxu0 0.0
    %1480 = vmatpush1.msra.mxu0 0.0
    %1481 = vmatprep.subr.mxu0 0.0
    %1482 = vmatpush1.msra.mxu0 0.0
    %1483 = vmatprep.subr.mxu0 0.0
    %1484 = vmatpush1.msra.mxu0 0.0
    %1485 = vmatprep.subr.mxu0 0.0
    %1486 = vmatpush1.msra.mxu0 0.0
    %1487 = vmatprep.subr.mxu0 0.0
    %1488 = vmatpush1.msra.mxu0 0.0
    %1489 = vmatprep.subr.mxu0 0.0
    %1490 = vmatpush1.msra.mxu0 0.0
    %1491 = vmatprep.subr.mxu0 0.0
    %1492 = vmatpush1.msra.mxu0 0.0
    %1493 = vmatprep.subr.mxu0 0.0
    %1494 = vmatpush1.msra.mxu0 0.0
    %1495 = vmatprep.subr.mxu0 0.0
    %1496 = vmatpush1.msra.mxu0 0.0
    %1497 = vmatprep.subr.mxu0 0.0
    %1498 = vmatpush1.msra.mxu0 0.0
    %1499 = vmatprep.subr.mxu0 0.0
    %1500 = vmatpush1.msra.mxu0 0.0
    %1501 = vmatprep.subr.mxu0 0.0
    %1502 = vmatpush1.msra.mxu0 0.0
    %1503 = vmatprep.mubr.f32.mxu0 0.0
    %1504 = vmatmul.mubr.f32.gmra.mrb[0].mxu0 %v1437
    %v1505 = vpop.f32.mrb[0].mxu0
    %v1506 = vadd.f32 0.0, %v1505
    %v1507 = vpop.f32.mrb[0].mxu0
    %1508 = vdwg.mxu0
    %1509 = vrot.lane.b32.xlu0 %v895, 8
    %v1510 = vpop.permute.xlu0 %1509
    %1511 = vrot.lane.b32.xlu0 %v896, 8
    %v1512 = vpop.permute.xlu0 %1511
    %1515 = vrot.lane.b32.xlu0 %v897, 16
    %v1516 = vpop.permute.xlu0 %1515
    %1517 = vrot.lane.b32.xlu0 %v898, 16
    %v1518 = vpop.permute.xlu0 %1517
    %1521 = vrot.lane.b32.xlu0 %v899, 24
    %v1522 = vpop.permute.xlu0 %1521
    %1523 = vrot.lane.b32.xlu0 %v900, 24
    %v1524 = vpop.permute.xlu0 %1523
    %v1527 = vsel %vm193, %v893, %v1510
    %v1528 = vsel %vm193, %v894, %v1512
    %vm1529 = vcmask 130048
    %v1530 = vsel %vm1529, %v1527, %v1516
    %v1531 = vsel %vm1529, %v1528, %v1518
    %vm1532 = vcmask 195584
    %v1533 = vsel %vm1532, %v1530, %v1522
    %v1534 = vsel %vm1532, %v1531, %v1524
    %1535 = vst.msk [vmem:[%s3] sm:$0xff] %vm65, %v1533
    %1536 = vst.msk [vmem:[%s3 + $0x8] sm:$0xff] %vm65, %v1534
    %1539 = vrot.lane.b32.xlu0 %v1126, 8
    %v1540 = vpop.permute.xlu0 %1539
    %1541 = vrot.lane.b32.xlu0 %v1202, 8
    %v1542 = vpop.permute.xlu0 %1541
    %1547 = vrot.lane.b32.xlu0 %v1278, 16
    %v1548 = vpop.permute.xlu0 %1547
    %1549 = vrot.lane.b32.xlu0 %v1354, 16
    %v1550 = vpop.permute.xlu0 %1549
    %1555 = vrot.lane.b32.xlu0 %v1430, 24
    %v1556 = vpop.permute.xlu0 %1555
    %1557 = vrot.lane.b32.xlu0 %v1506, 24
    %v1558 = vpop.permute.xlu0 %1557
    %v1561 = vsel %vm193, %v974, %v1540
    %v1562 = vsel %vm193, %v1050, %v1542
    %v1563 = vsel %vm1529, %v1561, %v1548
    %v1564 = vsel %vm1529, %v1562, %v1550
    %v1565 = vsel %vm1532, %v1563, %v1556
    %v1566 = vsel %vm1532, %v1564, %v1558
    %v1567 = vlaneseq
    %v1568 = vshrl.u32 %v1567, 7
    %v1569 = vsub.s32 6, %v1568
    %v1570 = vrot.slane %v64, %v1569
    %v1572 = vsel %vm65, %v1565, 0
    %v1575 = vsel %vm65, %v1566, 0
    %1577 = vmatprep.subr.mxu0 0.0
    %1578 = vmatpush1.msra.mxu0 %v48
    %1579 = vmatprep.subr.mxu0 0.0
    %1580 = vmatpush1.msra.mxu0 %v49
    %1581 = vmatprep.subr.mxu0 0.0
    %1582 = vmatpush1.msra.mxu0 %v50
    %1583 = vmatprep.subr.mxu0 0.0
    %1584 = vmatpush1.msra.mxu0 %v51
    %1585 = vmatprep.subr.mxu0 0.0
    %1586 = vmatpush1.msra.mxu0 0.0
    %1587 = vmatprep.subr.mxu0 0.0
    %1588 = vmatpush1.msra.mxu0 0.0
    %1589 = vmatprep.subr.mxu0 0.0
    %1590 = vmatpush1.msra.mxu0 0.0
    %1591 = vmatprep.subr.mxu0 0.0
    %1592 = vmatpush1.msra.mxu0 0.0
    %1593 = vmatprep.subr.mxu0 0.0
    %1594 = vmatpush1.msra.mxu0 0.0
    %1595 = vmatprep.subr.mxu0 0.0
    %1596 = vmatpush1.msra.mxu0 0.0
    %1597 = vmatprep.subr.mxu0 0.0
    %1598 = vmatpush1.msra.mxu0 0.0
    %1599 = vmatprep.subr.mxu0 0.0
    %1600 = vmatpush1.msra.mxu0 0.0
    %1601 = vmatprep.subr.mxu0 0.0
    %1602 = vmatpush1.msra.mxu0 0.0
    %1603 = vmatprep.subr.mxu0 0.0
    %1604 = vmatpush1.msra.mxu0 0.0
    %1605 = vmatprep.subr.mxu0 0.0
    %1606 = vmatpush1.msra.mxu0 0.0
    %1607 = vmatprep.subr.mxu0 0.0
    %1608 = vmatpush1.msra.mxu0 0.0
    %1609 = vmatprep.subr.mxu0 0.0
    %1610 = vmatpush1.msra.mxu0 0.0
    %1611 = vmatprep.subr.mxu0 0.0
    %1612 = vmatpush1.msra.mxu0 0.0
    %1613 = vmatprep.subr.mxu0 0.0
    %1614 = vmatpush1.msra.mxu0 0.0
    %1615 = vmatprep.subr.mxu0 0.0
    %1616 = vmatpush1.msra.mxu0 0.0
    %1617 = vmatprep.subr.mxu0 0.0
    %1618 = vmatpush1.msra.mxu0 0.0
    %1619 = vmatprep.subr.mxu0 0.0
    %1620 = vmatpush1.msra.mxu0 0.0
    %1621 = vmatprep.subr.mxu0 0.0
    %1622 = vmatpush1.msra.mxu0 0.0
    %1623 = vmatprep.subr.mxu0 0.0
    %1624 = vmatpush1.msra.mxu0 0.0
    %1625 = vmatprep.subr.mxu0 0.0
    %1626 = vmatpush1.msra.mxu0 0.0
    %1627 = vmatprep.subr.mxu0 0.0
    %1628 = vmatpush1.msra.mxu0 0.0
    %1629 = vmatprep.subr.mxu0 0.0
    %1630 = vmatpush1.msra.mxu0 0.0
    %1631 = vmatprep.subr.mxu0 0.0
    %1632 = vmatpush1.msra.mxu0 0.0
    %1633 = vmatprep.subr.mxu0 0.0
    %1634 = vmatpush1.msra.mxu0 0.0
    %1635 = vmatprep.subr.mxu0 0.0
    %1636 = vmatpush1.msra.mxu0 0.0
    %1637 = vmatprep.subr.mxu0 0.0
    %1638 = vmatpush1.msra.mxu0 0.0
    %1639 = vmatprep.subr.mxu0 0.0
    %1640 = vmatpush1.msra.mxu0 0.0
    %1641 = vmatprep.mubr.f32.mxu0 0.0
    %1642 = vmatmul.mubr.f32.gmra.mrb[0].mxu0 %v1572
    %v1643 = vpop.f32.mrb[0].mxu0
    %v1644 = vadd.f32 %v1570, %v1643
    %v1645 = vpop.f32.mrb[0].mxu0
    %1646 = vmatprep.mubr.f32.mxu0 0.0
    %1647 = vmatmul.mubr.f32.gmra.mrb[0].mxu0 %v1575
    %v1648 = vpop.f32.mrb[0].mxu0
    %v1649 = vadd.f32 %v1570, %v1648
    %v1650 = vpop.f32.mrb[0].mxu0
    %1651 = vdwg.mxu0
    %v1652 = vadd.f32 %v1644, %v42
    %v1653 = vadd.f32 %v1649, %v43
    %v1654 = vsel %vm65, %v1652, 0.0
    %1655 = vadd.xlane.f32.xlu0 %v1654
    %v1656 = vpop.xlane.xlu0 %1655
    %v1657 = vsel %vm65, %v1653, 0.0
    %1658 = vadd.xlane.f32.xlu0 %v1657
    %v1659 = vpop.xlane.xlu0 %1658
    %v1660 = vmul.f32 %v1656, %v72
    %v1661 = vmul.f32 %v1659, %v72
    %v1662 = vsub.f32 %v1652, %v1660
    %v1663 = vsub.f32 %v1653, %v1661
    %v1664 = vmul.f32 %v1662, %v1662
    %v1665 = vmul.f32 %v1663, %v1663
    %v1666 = vsel %vm65, %v1664, 0.0
    %1667 = vadd.xlane.f32.xlu0 %v1666
    %v1668 = vpop.xlane.xlu0 %1667
    %v1669 = vsel %vm65, %v1665, 0.0
    %1670 = vadd.xlane.f32.xlu0 %v1669
    %v1671 = vpop.xlane.xlu0 %1670
    %v1672 = vmul.f32 %v1668, %v72
    %v1673 = vmul.f32 %v1671, %v72
    %v1674 = vadd.f32 %v1672, 1e-06
    %v1675 = vadd.f32 %v1673, 1e-06
    %v1676 = vrsqrt.pop %v1674
    %v1677 = vrsqrt.pop %v1675
    %v1678 = vmul.f32 %v1662, %v1676
    %v1679 = vmul.f32 %v1663, %v1677
    %v1680 = vlaneseq
    %v1681 = vshrl.u32 %v1680, 7
    %v1682 = vsub.s32 4, %v1681
    %v1683 = vrot.slane %v64, %v1682
    %v1684 = vmul.f32 %v1678, %v1683
    %v1685 = vmul.f32 %v1679, %v1683
    %v1686 = vlaneseq
    %v1687 = vshrl.u32 %v1686, 7
    %v1688 = vsub.s32 5, %v1687
    %v1689 = vrot.slane %v64, %v1688
    %v1690 = vadd.f32 %v1684, %v1689
    %v1691 = vadd.f32 %v1685, %v1689
    %v1692 = vlaneseq
    %v1693 = vshrl.u32 %v1692, 7
    %v1694 = vsub.s32 1, %v1693
    %v1695 = vrot.slane %v64, %v1694
    %v1697 = vsel %vm65, %v1690, 0
    %v1700 = vsel %vm65, %v1691, 0
    %1702 = vmatprep.subr.mxu0 0.0
    %1703 = vmatpush1.msra.mxu0 %v52
    %1704 = vmatprep.subr.mxu0 0.0
    %1705 = vmatpush1.msra.mxu0 %v53
    %1706 = vmatprep.subr.mxu0 0.0
    %1707 = vmatpush1.msra.mxu0 %v54
    %1708 = vmatprep.subr.mxu0 0.0
    %1709 = vmatpush1.msra.mxu0 %v55
    %1710 = vmatprep.subr.mxu0 0.0
    %1711 = vmatpush1.msra.mxu0 0.0
    %1712 = vmatprep.subr.mxu0 0.0
    %1713 = vmatpush1.msra.mxu0 0.0
    %1714 = vmatprep.subr.mxu0 0.0
    %1715 = vmatpush1.msra.mxu0 0.0
    %1716 = vmatprep.subr.mxu0 0.0
    %1717 = vmatpush1.msra.mxu0 0.0
    %1718 = vmatprep.subr.mxu0 0.0
    %1719 = vmatpush1.msra.mxu0 0.0
    %1720 = vmatprep.subr.mxu0 0.0
    %1721 = vmatpush1.msra.mxu0 0.0
    %1722 = vmatprep.subr.mxu0 0.0
    %1723 = vmatpush1.msra.mxu0 0.0
    %1724 = vmatprep.subr.mxu0 0.0
    %1725 = vmatpush1.msra.mxu0 0.0
    %1726 = vmatprep.subr.mxu0 0.0
    %1727 = vmatpush1.msra.mxu0 0.0
    %1728 = vmatprep.subr.mxu0 0.0
    %1729 = vmatpush1.msra.mxu0 0.0
    %1730 = vmatprep.subr.mxu0 0.0
    %1731 = vmatpush1.msra.mxu0 0.0
    %1732 = vmatprep.subr.mxu0 0.0
    %1733 = vmatpush1.msra.mxu0 0.0
    %1734 = vmatprep.subr.mxu0 0.0
    %1735 = vmatpush1.msra.mxu0 0.0
    %1736 = vmatprep.subr.mxu0 0.0
    %1737 = vmatpush1.msra.mxu0 0.0
    %1738 = vmatprep.subr.mxu0 0.0
    %1739 = vmatpush1.msra.mxu0 0.0
    %1740 = vmatprep.subr.mxu0 0.0
    %1741 = vmatpush1.msra.mxu0 0.0
    %1742 = vmatprep.subr.mxu0 0.0
    %1743 = vmatpush1.msra.mxu0 0.0
    %1744 = vmatprep.subr.mxu0 0.0
    %1745 = vmatpush1.msra.mxu0 0.0
    %1746 = vmatprep.subr.mxu0 0.0
    %1747 = vmatpush1.msra.mxu0 0.0
    %1748 = vmatprep.subr.mxu0 0.0
    %1749 = vmatpush1.msra.mxu0 0.0
    %1750 = vmatprep.subr.mxu0 0.0
    %1751 = vmatpush1.msra.mxu0 0.0
    %1752 = vmatprep.subr.mxu0 0.0
    %1753 = vmatpush1.msra.mxu0 0.0
    %1754 = vmatprep.subr.mxu0 0.0
    %1755 = vmatpush1.msra.mxu0 0.0
    %1756 = vmatprep.subr.mxu0 0.0
    %1757 = vmatpush1.msra.mxu0 0.0
    %1758 = vmatprep.subr.mxu0 0.0
    %1759 = vmatpush1.msra.mxu0 0.0
    %1760 = vmatprep.subr.mxu0 0.0
    %1761 = vmatpush1.msra.mxu0 0.0
    %1762 = vmatprep.subr.mxu0 0.0
    %1763 = vmatpush1.msra.mxu0 0.0
    %1764 = vmatprep.subr.mxu0 0.0
    %1765 = vmatpush1.msra.mxu0 0.0
    %1766 = vmatprep.mubr.f32.mxu0 0.0
    %1767 = vmatmul.mubr.f32.gmra.mrb[0].mxu0 %v1697
    %v1768 = vpop.f32.mrb[0].mxu0
    %v1769 = vadd.f32 %v1695, %v1768
    %v1770 = vpop.f32.mrb[0].mxu0
    %1771 = vmatprep.mubr.f32.mxu0 0.0
    %1772 = vmatmul.mubr.f32.gmra.mrb[0].mxu0 %v1700
    %v1773 = vpop.f32.mrb[0].mxu0
    %v1774 = vadd.f32 %v1695, %v1773
    %v1775 = vpop.f32.mrb[0].mxu0
    %1776 = vdwg.mxu0
    %v1777 = vmul.f32 %v1769, 0.5
    %v1778 = vmul.f32 %v1774, 0.5
    %v1779 = vmul.f32 %v1769, 0.70710677
    %v1780 = vmul.f32 %v1774, 0.70710677
    %v1781 = verf.f32.pop %v1779
    %v1782 = verf.f32.pop %v1780
    %v1783 = vadd.f32 %v1781, 1.0
    %v1784 = vadd.f32 %v1782, 1.0
    %v1785 = vmul.f32 %v1777, %v1783
    %v1786 = vmul.f32 %v1778, %v1784
    %v1787 = vlaneseq
    %v1788 = vshrl.u32 %v1787, 7
    %v1789 = vsub.s32 7, %v1788
    %v1790 = vrot.slane %v64, %v1789
    %vm1791 = vcmask 523264
    %v1793 = vsel %vm1791, %v1785, 0
    %v1796 = vsel %vm1791, %v1786, 0
    %1798 = vmatprep.subr.mxu0 0.0
    %1799 = vmatpush1.msra.mxu0 %v56
    %1800 = vmatprep.subr.mxu0 0.0
    %1801 = vmatpush1.msra.mxu0 %v57
    %1802 = vmatprep.subr.mxu0 0.0
    %1803 = vmatpush1.msra.mxu0 %v58
    %1804 = vmatprep.subr.mxu0 0.0
    %1805 = vmatpush1.msra.mxu0 %v59
    %1806 = vmatprep.subr.mxu0 0.0
    %1807 = vmatpush1.msra.mxu0 %v60
    %1808 = vmatprep.subr.mxu0 0.0
    %1809 = vmatpush1.msra.mxu0 %v61
    %1810 = vmatprep.subr.mxu0 0.0
    %1811 = vmatpush1.msra.mxu0 %v62
    %1812 = vmatprep.subr.mxu0 0.0
    %1813 = vmatpush1.msra.mxu0 %v63
    %1814 = vmatprep.subr.mxu0 0.0
    %1815 = vmatpush1.msra.mxu0 0.0
    %1816 = vmatprep.subr.mxu0 0.0
    %1817 = vmatpush1.msra.mxu0 0.0
    %1818 = vmatprep.subr.mxu0 0.0
    %1819 = vmatpush1.msra.mxu0 0.0
    %1820 = vmatprep.subr.mxu0 0.0
    %1821 = vmatpush1.msra.mxu0 0.0
    %1822 = vmatprep.subr.mxu0 0.0
    %1823 = vmatpush1.msra.mxu0 0.0
    %1824 = vmatprep.subr.mxu0 0.0
    %1825 = vmatpush1.msra.mxu0 0.0
    %1826 = vmatprep.subr.mxu0 0.0
    %1827 = vmatpush1.msra.mxu0 0.0
    %1828 = vmatprep.subr.mxu0 0.0
    %1829 = vmatpush1.msra.mxu0 0.0
    %1830 = vmatprep.subr.mxu0 0.0
    %1831 = vmatpush1.msra.mxu0 0.0
    %1832 = vmatprep.subr.mxu0 0.0
    %1833 = vmatpush1.msra.mxu0 0.0
    %1834 = vmatprep.subr.mxu0 0.0
    %1835 = vmatpush1.msra.mxu0 0.0
    %1836 = vmatprep.subr.mxu0 0.0
    %1837 = vmatpush1.msra.mxu0 0.0
    %1838 = vmatprep.subr.mxu0 0.0
    %1839 = vmatpush1.msra.mxu0 0.0
    %1840 = vmatprep.subr.mxu0 0.0
    %1841 = vmatpush1.msra.mxu0 0.0
    %1842 = vmatprep.subr.mxu0 0.0
    %1843 = vmatpush1.msra.mxu0 0.0
    %1844 = vmatprep.subr.mxu0 0.0
    %1845 = vmatpush1.msra.mxu0 0.0
    %1846 = vmatprep.subr.mxu0 0.0
    %1847 = vmatpush1.msra.mxu0 0.0
    %1848 = vmatprep.subr.mxu0 0.0
    %1849 = vmatpush1.msra.mxu0 0.0
    %1850 = vmatprep.subr.mxu0 0.0
    %1851 = vmatpush1.msra.mxu0 0.0
    %1852 = vmatprep.subr.mxu0 0.0
    %1853 = vmatpush1.msra.mxu0 0.0
    %1854 = vmatprep.subr.mxu0 0.0
    %1855 = vmatpush1.msra.mxu0 0.0
    %1856 = vmatprep.subr.mxu0 0.0
    %1857 = vmatpush1.msra.mxu0 0.0
    %1858 = vmatprep.subr.mxu0 0.0
    %1859 = vmatpush1.msra.mxu0 0.0
    %1860 = vmatprep.subr.mxu0 0.0
    %1861 = vmatpush1.msra.mxu0 0.0
    %1862 = vmatprep.mubr.f32.mxu0 0.0
    %1863 = vmatmul.mubr.f32.gmra.mrb[0].mxu0 %v1793
    %v1864 = vpop.f32.mrb[0].mxu0
    %v1865 = vadd.f32 %v1790, %v1864
    %v1866 = vpop.f32.mrb[0].mxu0
    %1867 = vmatprep.mubr.f32.mxu0 0.0
    %1868 = vmatmul.mubr.f32.gmra.mrb[0].mxu0 %v1796
    %v1869 = vpop.f32.mrb[0].mxu0
    %v1870 = vadd.f32 %v1790, %v1869
    %v1871 = vpop.f32.mrb[0].mxu0
    %1872 = vdwg.mxu0
    %v1873 = vadd.f32 %v1865, %v1652
    %v1874 = vadd.f32 %v1870, %v1653
    %1875 = vst.msk [vmem:[#allocation7] sm:$0xff] %vm65, %v1873
    %1876 = vst.msk [vmem:[#allocation7 + $0x8] sm:$0xff] %vm65, %v1874
    // Predicated region
    $region18: #{block_forward.1} parent=1 // pred_check
      _
    $region19: #{block_forward.1} parent=1 // pred_check_branch
      %1878 = sbr.rel (0) target = $region21
    $region20: #{block_forward.1} parent=1 // pred_region
      %s1880 = ssub.s32 256, 256
      %1881 = vsyncadd [#allocation4], %s1880
      %s1882 = sshll.u32 [#allocation7], 4
      %s1883 = int_to_ptr.vmem [resolvable:$true] %s1882
      %1888 = dma.vmem_to_hbm [thread:$0]  %s1883, 256, %s2, [#allocation4], 128, 128, 8
    $region21: #{block_forward.1} parent=1 // pred_fallthru
      _
    // Predicated region
    $region22: #{block_forward.1} parent=1 // pred_check
      _
    $region23: #{block_forward.1} parent=1 // pred_check_branch
      %1890 = sbr.rel (0) target = $region25
    $region24: #{block_forward.1} parent=1 // pred_region
      _
    $region25: #{block_forward.1} parent=1 // pred_fallthru
      _
    // Predicated region
    $region26: #{block_forward.1} parent=1 // pred_check
      _
    $region27: #{block_forward.1} parent=1 // pred_check_branch
      %1892 = sbr.rel (0) target = $region29
    $region28: #{block_forward.1} parent=1 // pred_region
      %1893 = dma.done [#allocation4], 256
    $region29: #{block_forward.1} parent=1 // pred_fallthru
      _
    // Predicated region
    $region30: #{block_forward.1} parent=1 // pred_check
      _
    $region31: #{block_forward.1} parent=1 // pred_check_branch
      %1895 = sbr.rel (0) target = $region33
    $region32: #{block_forward.1} parent=1 // pred_region
      _
    $region33: #{block_forward.1} parent=1 // pred_fallthru
      _
    %1896 = vsyncpa [#allocation3], 1
    %1897 = vsyncpa [#allocation6], 1
    %1898 = vsyncpa [#allocation4], 1

</llo_original>
